<compile_context>
chip_gen: v5e
topology: v5e:2x2
jax: 0.10.0
libtpu: 0.0.40
codegen_flags: <defaults>
</compile_context>

<pallas_src>
import functools
import math

import jax
import jax.numpy as jnp
from jax.experimental import pallas as pl
from jax.experimental.pallas import tpu as pltpu


# ----------------------------------------------------------------------------
# Kernels
# ----------------------------------------------------------------------------

def _layernorm_kernel(x_ref, g_ref, b_ref, o_ref, *, eps):
    # x: [tm, D], g/b: [1, D].  Matches the reference exactly:
    #   gamma * (x - mean) / (sqrt(biased_var) + eps) + beta
    x = x_ref[...].astype(jnp.float32)
    mean = jnp.mean(x, axis=-1, keepdims=True)
    var = jnp.mean(jnp.square(x - mean), axis=-1, keepdims=True)  # unbiased=False
    std = jnp.sqrt(var)
    o_ref[...] = (g_ref[...] * (x - mean) / (std + eps) + b_ref[...]).astype(o_ref.dtype)


def _residual_add_kernel(x_ref, y_ref, o_ref):
    o_ref[...] = (x_ref[...] + y_ref[...]).astype(o_ref.dtype)


def _fused_sublayer_ffn_kernel(x_ref, g_ref, b_ref,
                               w1_ref, b1_ref, w2_ref, b2_ref,
                               o_ref, *, eps):
    # Fused SublayerConnection with a position-wise FFN sublayer:
    #   out = x + relu(LN(x) @ W1 + b1) @ W2 + b2          (dropout = identity)
    x = x_ref[...].astype(jnp.float32)                      # [tm, D]
    mean = jnp.mean(x, axis=-1, keepdims=True)
    var = jnp.mean(jnp.square(x - mean), axis=-1, keepdims=True)
    std = jnp.sqrt(var)
    nx = g_ref[...] * (x - mean) / (std + eps) + b_ref[...]  # f32 LN, exact semantics

    # bf16 MXU inputs, f32 accumulation (per perf review); intermediate stays on-chip.
    h = jnp.dot(nx.astype(jnp.bfloat16), w1_ref[...],
                preferred_element_type=jnp.float32) + b1_ref[...]
    h = jnp.maximum(h, 0.0)
    y = jnp.dot(h.astype(jnp.bfloat16), w2_ref[...],
                preferred_element_type=jnp.float32) + b2_ref[...]

    o_ref[...] = (x + y).astype(o_ref.dtype)                 # residual add in f32


# ----------------------------------------------------------------------------
# Wrappers (tiling / padding plumbing)
# ----------------------------------------------------------------------------

def _row_tiling(m, block_m=256):
    """Pick a row-tile size (multiple of 8) and the padded row count."""
    if m <= block_m:
        tm = max(8, -(-m // 8) * 8)      # round up to multiple of 8, single tile
        return tm, tm
    mp = -(-m // block_m) * block_m
    return block_m, mp


def _pad_rows(x2d, mp):
    m = x2d.shape[0]
    if mp == m:
        return x2d
    return jnp.pad(x2d, ((0, mp - m), (0, 0)))


def layernorm_pallas(x, gamma, beta, eps=1e-6, block_m=256):
    """Tiled Pallas LayerNorm over the last dim of x (any leading shape)."""
    orig_shape = x.shape
    d = orig_shape[-1]
    x2d = x.reshape(-1, d)
    m = x2d.shape[0]
    tm, mp = _row_tiling(m, block_m)
    xp = _pad_rows(x2d, mp)

    out = pl.pallas_call(
        functools.partial(_layernorm_kernel, eps=eps),
        out_shape=jax.ShapeDtypeStruct((mp, d), x.dtype),
        grid=(mp // tm,),
        in_specs=[
            pl.BlockSpec((tm, d), lambda i: (i, 0)),
            pl.BlockSpec((1, d), lambda i: (0, 0)),
            pl.BlockSpec((1, d), lambda i: (0, 0)),
        ],
        out_specs=pl.BlockSpec((tm, d), lambda i: (i, 0)),
        compiler_params=pltpu.CompilerParams(dimension_semantics=("parallel",)),
    )(xp,
      gamma.reshape(1, d).astype(jnp.float32),
      beta.reshape(1, d).astype(jnp.float32))
    return out[:m].reshape(orig_shape)


def residual_add_pallas(x, y, block_m=256):
    """Tiled elementwise x + y (residual connection)."""
    orig_shape = x.shape
    d = orig_shape[-1]
    x2d = x.reshape(-1, d)
    y2d = y.reshape(-1, d).astype(x.dtype)
    m = x2d.shape[0]
    tm, mp = _row_tiling(m, block_m)
    xp, yp = _pad_rows(x2d, mp), _pad_rows(y2d, mp)

    out = pl.pallas_call(
        _residual_add_kernel,
        out_shape=jax.ShapeDtypeStruct((mp, d), x.dtype),
        grid=(mp // tm,),
        in_specs=[
            pl.BlockSpec((tm, d), lambda i: (i, 0)),
            pl.BlockSpec((tm, d), lambda i: (i, 0)),
        ],
        out_specs=pl.BlockSpec((tm, d), lambda i: (i, 0)),
        compiler_params=pltpu.CompilerParams(dimension_semantics=("parallel",)),
    )(xp, yp)
    return out[:m].reshape(orig_shape)


def sublayer_connection(x, sublayer, gamma, beta, eps=1e-6):
    """Generic module contract: x + sublayer(LayerNorm(x)) for any JAX callable."""
    return residual_add_pallas(x, sublayer(layernorm_pallas(x, gamma, beta, eps)))


def sublayer_connection_ffn(x, gamma, beta, w1, b1, w2, b2, eps=1e-6, block_m=256):
    """Fully fused SublayerConnection with a 2-layer FFN sublayer (single kernel)."""
    orig_shape = x.shape
    d = orig_shape[-1]
    f = w1.shape[1]
    x2d = x.reshape(-1, d)
    m = x2d.shape[0]
    tm, mp = _row_tiling(m, block_m)
    xp = _pad_rows(x2d, mp)

    out = pl.pallas_call(
        functools.partial(_fused_sublayer_ffn_kernel, eps=eps),
        out_shape=jax.ShapeDtypeStruct((mp, d), x.dtype),
        grid=(mp // tm,),
        in_specs=[
            pl.BlockSpec((tm, d), lambda i: (i, 0)),       # x tile (streams over M)
            pl.BlockSpec((1, d), lambda i: (0, 0)),        # gamma (resident)
            pl.BlockSpec((1, d), lambda i: (0, 0)),        # beta
            pl.BlockSpec((d, f), lambda i: (0, 0)),        # W1 (bf16, resident)
            pl.BlockSpec((1, f), lambda i: (0, 0)),        # b1
            pl.BlockSpec((f, d), lambda i: (0, 0)),        # W2 (bf16, resident)
            pl.BlockSpec((1, d), lambda i: (0, 0)),        # b2
        ],
        out_specs=pl.BlockSpec((tm, d), lambda i: (i, 0)),
        compiler_params=pltpu.CompilerParams(
            dimension_semantics=("parallel",),
            vmem_limit_bytes=48 * 1024 * 1024,   # headroom; fits v7x 64 MiB VMEM
        ),
    )(xp,
      gamma.reshape(1, d).astype(jnp.float32),
      beta.reshape(1, d).astype(jnp.float32),
      w1.astype(jnp.bfloat16),
      b1.reshape(1, f).astype(jnp.float32),
      w2.astype(jnp.bfloat16),
      b2.reshape(1, d).astype(jnp.float32))
    return out[:m].reshape(orig_shape)


# ----------------------------------------------------------------------------
# Demo / self-check
# ----------------------------------------------------------------------------

if __name__ == "__main__":
    # Lane-dense small shapes (D, d_ff multiples of 128 per the perf review).
    B, S, D, F = 2, 256, 128, 256
    eps = 1e-6

    key = jax.random.PRNGKey(0)
    kx, kg, kb, k1, kb1, k2, kb2 = jax.random.split(key, 7)
    x = jax.random.normal(kx, (B, S, D), jnp.float32)
    gamma = 1.0 + 0.1 * jax.random.normal(kg, (D,), jnp.float32)
    beta = 0.1 * jax.random.normal(kb, (D,), jnp.float32)
    w1 = jax.random.normal(k1, (D, F), jnp.float32) * (1.0 / math.sqrt(D))
    b1 = 0.01 * jax.random.normal(kb1, (F,), jnp.float32)
    w2 = jax.random.normal(k2, (F, D), jnp.float32) * (1.0 / math.sqrt(F))
    b2 = 0.01 * jax.random.normal(kb2, (D,), jnp.float32)

    # Pure-JAX reference (same numerics: f32 LN/residual, bf16 matmul, f32 acc).
    def ln_ref(v):
        mean = jnp.mean(v, axis=-1, keepdims=True)
        std = jnp.sqrt(jnp.mean(jnp.square(v - mean), axis=-1, keepdims=True))
        return gamma * (v - mean) / (std + eps) + beta

    def ffn_sublayer(nx):
        h = jnp.dot(nx.astype(jnp.bfloat16), w1.astype(jnp.bfloat16),
                    preferred_element_type=jnp.float32) + b1
        h = jnp.maximum(h, 0.0)
        return jnp.dot(h.astype(jnp.bfloat16), w2.astype(jnp.bfloat16),
                       preferred_element_type=jnp.float32) + b2

    ref = x + ffn_sublayer(ln_ref(x))            # dropout is identity at inference

    # Fused single-kernel path.
    fused_fn = jax.jit(lambda v: sublayer_connection_ffn(v, gamma, beta, w1, b1, w2, b2, eps))
    out_fused = fused_fn(x)
    jax.block_until_ready(out_fused)

    # Generic path (Pallas LN + arbitrary sublayer callable + Pallas residual add).
    generic_fn = jax.jit(lambda v: sublayer_connection(v, ffn_sublayer, gamma, beta, eps))
    out_generic = generic_fn(x)
    jax.block_until_ready(out_generic)

    assert out_fused.shape == x.shape, out_fused.shape
    assert out_generic.shape == x.shape, out_generic.shape
    assert bool(jnp.all(jnp.isfinite(out_fused)))
    assert bool(jnp.all(jnp.isfinite(out_generic)))

    err_fused = float(jnp.max(jnp.abs(out_fused - ref)))
    err_generic = float(jnp.max(jnp.abs(out_generic - ref)))
    assert err_fused < 2e-2, f"fused path mismatch: {err_fused}"
    assert err_generic < 2e-2, f"generic path mismatch: {err_generic}"

    print("KERNEL_OK")
</pallas_src>

<mosaic_0001>
module attributes {stable_mosaic.version = 11 : i64} {
  func.func @_fused_sublayer_ffn_kernel(%arg0: i32, %arg1: memref<256x128xf32, #tpu.memory_space<vmem>>, %arg2: memref<1x128xf32, #tpu.memory_space<vmem>>, %arg3: memref<1x128xf32, #tpu.memory_space<vmem>>, %arg4: memref<128x256xbf16, #tpu.memory_space<vmem>>, %arg5: memref<1x256xf32, #tpu.memory_space<vmem>>, %arg6: memref<256x128xbf16, #tpu.memory_space<vmem>>, %arg7: memref<1x128xf32, #tpu.memory_space<vmem>>, %arg8: memref<256x128xf32, #tpu.memory_space<vmem>>) attributes {dimension_semantics = [#tpu.dimension_semantics<parallel>], iteration_bounds = array<i64: 2>, scalar_prefetch = 0 : i64, scratch_operands = 0 : i64, tpu.core_type = #tpu.core_type<tc>, window_params = [{transform_indices = @transform_0, window_bounds = array<i64: 256, 128>}, {pipeline_mode = #tpu.pipeline_mode<synchronous>, transform_indices = @transform_1, window_bounds = array<i64: 1, 128>}, {pipeline_mode = #tpu.pipeline_mode<synchronous>, transform_indices = @transform_2, window_bounds = array<i64: 1, 128>}, {pipeline_mode = #tpu.pipeline_mode<synchronous>, transform_indices = @transform_3, window_bounds = array<i64: 128, 256>}, {pipeline_mode = #tpu.pipeline_mode<synchronous>, transform_indices = @transform_4, window_bounds = array<i64: 1, 256>}, {pipeline_mode = #tpu.pipeline_mode<synchronous>, transform_indices = @transform_5, window_bounds = array<i64: 256, 128>}, {pipeline_mode = #tpu.pipeline_mode<synchronous>, transform_indices = @transform_6, window_bounds = array<i64: 1, 128>}, {transform_indices = @transform_7, window_bounds = array<i64: 256, 128>}]} {
    %c0 = arith.constant 0 : index
    %c0_0 = arith.constant 0 : index
    %0 = vector.load %arg1[%c0, %c0_0] : memref<256x128xf32, #tpu.memory_space<vmem>>, vector<256x128xf32>
    %cst = arith.constant dense<0.000000e+00> : vector<256xf32>
    %1 = vector.multi_reduction <add>, %0, %cst [1] : vector<256x128xf32> to vector<256xf32>
    %2 = vector.shape_cast %1 : vector<256xf32> to vector<256x1xf32>
    %cst_1 = arith.constant 1.280000e+02 : f32
    %3 = vector.broadcast %cst_1 : f32 to vector<256x1xf32>
    %4 = arith.divf %2, %3 : vector<256x1xf32>
    %5 = vector.broadcast %4 : vector<256x1xf32> to vector<256x128xf32>
    %6 = arith.subf %0, %5 : vector<256x128xf32>
    %7 = arith.mulf %6, %6 : vector<256x128xf32>
    %cst_2 = arith.constant dense<0.000000e+00> : vector<256xf32>
    %8 = vector.multi_reduction <add>, %7, %cst_2 [1] : vector<256x128xf32> to vector<256xf32>
    %9 = vector.shape_cast %8 : vector<256xf32> to vector<256x1xf32>
    %cst_3 = arith.constant 1.280000e+02 : f32
    %10 = vector.broadcast %cst_3 : f32 to vector<256x1xf32>
    %11 = arith.divf %9, %10 : vector<256x1xf32>
    %12 = math.sqrt %11 : vector<256x1xf32>
    %c0_4 = arith.constant 0 : index
    %c0_5 = arith.constant 0 : index
    %13 = vector.load %arg2[%c0_4, %c0_5] : memref<1x128xf32, #tpu.memory_space<vmem>>, vector<1x128xf32>
    %14 = vector.broadcast %4 : vector<256x1xf32> to vector<256x128xf32>
    %15 = arith.subf %0, %14 : vector<256x128xf32>
    %16 = vector.broadcast %13 : vector<1x128xf32> to vector<256x128xf32>
    %17 = arith.mulf %16, %15 : vector<256x128xf32>
    %cst_6 = arith.constant 9.99999997E-7 : f32
    %18 = vector.broadcast %cst_6 : f32 to vector<256x1xf32>
    %19 = arith.addf %12, %18 : vector<256x1xf32>
    %20 = vector.broadcast %19 : vector<256x1xf32> to vector<256x128xf32>
    %21 = arith.divf %17, %20 : vector<256x128xf32>
    %c0_7 = arith.constant 0 : index
    %c0_8 = arith.constant 0 : index
    %22 = vector.load %arg3[%c0_7, %c0_8] : memref<1x128xf32, #tpu.memory_space<vmem>>, vector<1x128xf32>
    %23 = vector.broadcast %22 : vector<1x128xf32> to vector<256x128xf32>
    %24 = arith.addf %21, %23 : vector<256x128xf32>
    %25 = arith.truncf %24 : vector<256x128xf32> to vector<256x128xbf16>
    %c0_9 = arith.constant 0 : index
    %c0_10 = arith.constant 0 : index
    %26 = vector.load %arg4[%c0_9, %c0_10] : memref<128x256xbf16, #tpu.memory_space<vmem>>, vector<128x256xbf16>
    %cst_11 = arith.constant dense<0.000000e+00> : vector<256x256xf32>
    %27 = tpu.matmul %25, %26, %cst_11 {dimension_numbers = #tpu.dot_dimension_numbers<[1], [0], [0], [1], [0, 0, 1, 1], [], []>} : vector<256x128xbf16>, vector<128x256xbf16>, vector<256x256xf32> -> vector<256x256xf32>
    %c0_12 = arith.constant 0 : index
    %c0_13 = arith.constant 0 : index
    %28 = vector.load %arg5[%c0_12, %c0_13] : memref<1x256xf32, #tpu.memory_space<vmem>>, vector<1x256xf32>
    %29 = vector.broadcast %28 : vector<1x256xf32> to vector<256x256xf32>
    %30 = arith.addf %27, %29 : vector<256x256xf32>
    %cst_14 = arith.constant 0.000000e+00 : f32
    %31 = vector.broadcast %cst_14 : f32 to vector<256x256xf32>
    %32 = arith.maximumf %30, %31 : vector<256x256xf32>
    %33 = arith.truncf %32 : vector<256x256xf32> to vector<256x256xbf16>
    %c0_15 = arith.constant 0 : index
    %c0_16 = arith.constant 0 : index
    %34 = vector.load %arg6[%c0_15, %c0_16] : memref<256x128xbf16, #tpu.memory_space<vmem>>, vector<256x128xbf16>
    %cst_17 = arith.constant dense<0.000000e+00> : vector<256x128xf32>
    %35 = tpu.matmul %33, %34, %cst_17 {dimension_numbers = #tpu.dot_dimension_numbers<[1], [0], [0], [1], [0, 0, 1, 1], [], []>} : vector<256x256xbf16>, vector<256x128xbf16>, vector<256x128xf32> -> vector<256x128xf32>
    %c0_18 = arith.constant 0 : index
    %c0_19 = arith.constant 0 : index
    %36 = vector.load %arg7[%c0_18, %c0_19] : memref<1x128xf32, #tpu.memory_space<vmem>>, vector<1x128xf32>
    %37 = vector.broadcast %36 : vector<1x128xf32> to vector<256x128xf32>
    %38 = arith.addf %35, %37 : vector<256x128xf32>
    %39 = arith.addf %0, %38 : vector<256x128xf32>
    %c0_20 = arith.constant 0 : index
    %c0_21 = arith.constant 0 : index
    %40 = vector.load %arg8[%c0_20, %c0_21] : memref<256x128xf32, #tpu.memory_space<vmem>>, vector<256x128xf32>
    tpu.vector_store %arg8[%c0_20, %c0_21], %39 {strides = array<i32>} : memref<256x128xf32, #tpu.memory_space<vmem>>, vector<256x128xf32>,
    return
  }
  func.func @transform_0(%arg0: i32) -> (i32, i32) {
    %c0_i32 = arith.constant 0 : i32
    %c0_i32_0 = arith.constant 0 : i32
    return %arg0, %c0_i32 : i32, i32
  }
  func.func @transform_1(%arg0: i32) -> (i32, i32) {
    %c0_i32 = arith.constant 0 : i32
    %c0_i32_0 = arith.constant 0 : i32
    %c0_i32_1 = arith.constant 0 : i32
    return %c0_i32, %c0_i32_0 : i32, i32
  }
  func.func @transform_2(%arg0: i32) -> (i32, i32) {
    %c0_i32 = arith.constant 0 : i32
    %c0_i32_0 = arith.constant 0 : i32
    %c0_i32_1 = arith.constant 0 : i32
    return %c0_i32, %c0_i32_0 : i32, i32
  }
  func.func @transform_3(%arg0: i32) -> (i32, i32) {
    %c0_i32 = arith.constant 0 : i32
    %c0_i32_0 = arith.constant 0 : i32
    %c0_i32_1 = arith.constant 0 : i32
    return %c0_i32, %c0_i32_0 : i32, i32
  }
  func.func @transform_4(%arg0: i32) -> (i32, i32) {
    %c0_i32 = arith.constant 0 : i32
    %c0_i32_0 = arith.constant 0 : i32
    %c0_i32_1 = arith.constant 0 : i32
    return %c0_i32, %c0_i32_0 : i32, i32
  }
  func.func @transform_5(%arg0: i32) -> (i32, i32) {
    %c0_i32 = arith.constant 0 : i32
    %c0_i32_0 = arith.constant 0 : i32
    %c0_i32_1 = arith.constant 0 : i32
    return %c0_i32, %c0_i32_0 : i32, i32
  }
  func.func @transform_6(%arg0: i32) -> (i32, i32) {
    %c0_i32 = arith.constant 0 : i32
    %c0_i32_0 = arith.constant 0 : i32
    %c0_i32_1 = arith.constant 0 : i32
    return %c0_i32, %c0_i32_0 : i32, i32
  }
  func.func @transform_7(%arg0: i32) -> (i32, i32) {
    %c0_i32 = arith.constant 0 : i32
    %c0_i32_0 = arith.constant 0 : i32
    return %arg0, %c0_i32 : i32, i32
  }
}

</mosaic_0001>

<llo_original>
// kernel: _lambda_.1
$region0: #{_lambda_.1}
  #allocation0 [shape = 'u32[]', space=smem, size = 0x4, offset = 0x4, fixed_abs, tag = 'smem constant byte address 0x4 - core index']
  #allocation1 [shape = 'u32[72,128]{1,0:T(1,128)}', space=vmem, size = 0x9000, scoped, tag = 'internal scratch']
  %s0 = inlined_call_operand.hbm [shape: f32[512,128], index: 0, kind: input, shape index: {}]
  %s1 = inlined_call_operand.vmem [shape: f32[1,128], index: 1, kind: input, shape index: {}]
  %s2 = inlined_call_operand.vmem [shape: f32[1,128], index: 2, kind: input, shape index: {}]
  %s3 = inlined_call_operand.hbm [shape: bf16[128,256], index: 3, kind: input, shape index: {}]
  %s4 = inlined_call_operand.vmem [shape: f32[1,256], index: 4, kind: input, shape index: {}]
  %s5 = inlined_call_operand.hbm [shape: bf16[256,128], index: 5, kind: input, shape index: {}]
  %s6 = inlined_call_operand.hbm [shape: f32[1,128], index: 6, kind: input, shape index: {}]
  %s7 = inlined_call_operand.hbm [shape: f32[512,128], index: 7, kind: output, shape index: {}]
  %s8 = sld [smem:[#allocation0]]
  $region77: #{_lambda_.1} parent=0
    _
  %s10 = ssub.s32 1, %s8
  %s11 = scalar_select 0, %s10, %s8
  $region1: #{_lambda_.1} parent=0
    #allocation2 [shape = 'u8[262144]{0}', space=vmem, size = 0x40000, scoped, tag = 'input window, operand 0']
    #allocation3 [shape = 's32[2]{0}', space=sflag, size = 0x8, scoped, tag = 'scoped memory for _lambda_.1']
    #allocation4 [shape = 's32[2]{0}', space=sflag, size = 0x8, scoped, tag = 'scoped memory for _lambda_.1']
    #allocation5 [shape = 'u8[65536]{0}', space=vmem, size = 0x10000, scoped, tag = 'input window, operand 3, single buffered']
    #allocation6 [shape = 's32[1]{0}', space=sflag, size = 0x4, scoped, tag = 'scoped memory for _lambda_.1']
    #allocation7 [shape = 'u8[65536]{0}', space=vmem, size = 0x10000, scoped, tag = 'input window, operand 5, single buffered']
    #allocation8 [shape = 'u8[512]{0}', space=vmem, size = 0x400, scoped, tag = 'input window, operand 6, single buffered']
    #allocation9 [shape = 's32[1]{0}', space=sflag, size = 0x4, scoped, tag = 'scoped memory for _lambda_.1']
    #allocation10 [shape = 'u8[262144]{0}', space=vmem, size = 0x40000, scoped, tag = 'output window, operand 0']
    %12 = vsyncpa [#allocation3], 0
    %s13 = scalar_lea.sflag [#allocation3], 1
    %14 = vsyncpa %s13, 0
    %15 = vsyncpa [#allocation6], 0
    %16 = vsyncpa [#allocation9], 0
    %17 = vsyncpa [#allocation4], 0
    %s18 = scalar_lea.sflag [#allocation4], 1
    %19 = vsyncpa %s18, 0
    loop: start=0, step=1, limit=4
    $region2: #{_lambda_.1} parent=1 // loop_pre_header
      _
    $region3: #{_lambda_.1} parent=1 // loop_header
      %s21 = sphi 0, %s25
      %p22 = scmp.ge.s32.totalorder %s21, 4
      %s31 = sphi 0, %s33
      %s34 = sphi 0, %s31
      %s35 = sphi 0, %s34
      %s51 = sphi 0, %s35
      %s55 = sphi 0, %s55
      %s57 = sphi 0, %s55
      %s58 = sphi 0, %s57
      %s72 = sphi 0, %s58
      %s76 = sphi 0, %s76
      %s78 = sphi 0, %s76
      %s79 = sphi 0, %s78
      %s93 = sphi 0, %s79
      %s97 = sphi 0, %s97
      %s99 = sphi 0, %s97
      %s100 = sphi 0, %s99
      %s114 = sphi 0, %s100
      %s118 = sphi 0, %s118
      %s120 = sphi 0, %s118
      %s121 = sphi 0, %s120
      %s135 = sphi 0, %s121
      %s139 = sphi 0, %s139
      %s141 = sphi 0, %s139
      %s142 = sphi 0, %s141
      %s156 = sphi 0, %s142
      %s160 = sphi 0, %s160
      %s162 = sphi 0, %s160
      %s163 = sphi 0, %s162
      %s177 = sphi 0, %s163
      %s183 = sphi 0, %s185
      %s186 = sphi 0, %s183
      %s187 = sphi 0, %s186
      %s203 = sphi 0, %s187
    $region4: #{_lambda_.1} parent=1 // loop_header_branch
      %24 = sbr.rel (%p22) target = $region8
    $region5: #{_lambda_.1} parent=1 // loop_body
      %s26 = ssub.s32 %s21, 1
      %s27 = ssub.s32 %s21, 2
      %s28 = sadd.s32 %s21, 1
      %s29 = ssub.s32 %s21, %s28
      %p30 = scmp.eq.s32.totalorder %s29, 0
      %s32 = sadd.s32 %s31, 1
      %s33 = scalar_select %p30, %s31, %s32
      %p36 = pneg %p30
      %p37 = scmp.eq.s32.totalorder %s21, 1
      %p38 = por %p36, %p37
      %p39 = scmp.ne.s32.totalorder %s31, %s34
      %p40 = scmp.eq.s32.totalorder %s21, 0
      %p41 = por %p39, %p40
      %p42 = scmp.ne.s32.totalorder %s31, %s34
      %p43 = scmp.eq.s32.totalorder %s26, 1
      %p44 = por %p42, %p43
      %p45 = scmp.ne.s32.totalorder %s34, %s35
      %p46 = scmp.eq.s32.totalorder %s26, 0
      %p47 = por %p45, %p46
      %p48 = scmp.ne.s32.totalorder %s34, %s35
      %p49 = scmp.eq.s32.totalorder %s27, 1
      %p50 = por %p48, %p49
      %p52 = scmp.ne.s32.totalorder %s35, %s51
      %p53 = scmp.eq.s32.totalorder %s27, 0
      %p54 = por %p52, %p53
      %s56 = sadd.s32 %s55, 1
      %p59 = scmp.eq.s32.totalorder %s21, 1
      %p60 = scmp.ne.s32.totalorder %s55, %s57
      %p61 = scmp.eq.s32.totalorder %s21, 0
      %p62 = por %p60, %p61
      %p63 = scmp.ne.s32.totalorder %s55, %s57
      %p64 = scmp.eq.s32.totalorder %s26, 1
      %p65 = por %p63, %p64
      %p66 = scmp.ne.s32.totalorder %s57, %s58
      %p67 = scmp.eq.s32.totalorder %s26, 0
      %p68 = por %p66, %p67
      %p69 = scmp.ne.s32.totalorder %s57, %s58
      %p70 = scmp.eq.s32.totalorder %s27, 1
      %p71 = por %p69, %p70
      %p73 = scmp.ne.s32.totalorder %s58, %s72
      %p74 = scmp.eq.s32.totalorder %s27, 0
      %p75 = por %p73, %p74
      %s77 = sadd.s32 %s76, 1
      %p80 = scmp.eq.s32.totalorder %s21, 1
      %p81 = scmp.ne.s32.totalorder %s76, %s78
      %p82 = scmp.eq.s32.totalorder %s21, 0
      %p83 = por %p81, %p82
      %p84 = scmp.ne.s32.totalorder %s76, %s78
      %p85 = scmp.eq.s32.totalorder %s26, 1
      %p86 = por %p84, %p85
      %p87 = scmp.ne.s32.totalorder %s78, %s79
      %p88 = scmp.eq.s32.totalorder %s26, 0
      %p89 = por %p87, %p88
      %p90 = scmp.ne.s32.totalorder %s78, %s79
      %p91 = scmp.eq.s32.totalorder %s27, 1
      %p92 = por %p90, %p91
      %p94 = scmp.ne.s32.totalorder %s79, %s93
      %p95 = scmp.eq.s32.totalorder %s27, 0
      %p96 = por %p94, %p95
      %s98 = sadd.s32 %s97, 1
      %p101 = scmp.eq.s32.totalorder %s21, 1
      %p102 = scmp.ne.s32.totalorder %s97, %s99
      %p103 = scmp.eq.s32.totalorder %s21, 0
      %p104 = por %p102, %p103
      %p105 = scmp.ne.s32.totalorder %s97, %s99
      %p106 = scmp.eq.s32.totalorder %s26, 1
      %p107 = por %p105, %p106
      %p108 = scmp.ne.s32.totalorder %s99, %s100
      %p109 = scmp.eq.s32.totalorder %s26, 0
      %p110 = por %p108, %p109
      %p111 = scmp.ne.s32.totalorder %s99, %s100
      %p112 = scmp.eq.s32.totalorder %s27, 1
      %p113 = por %p111, %p112
      %p115 = scmp.ne.s32.totalorder %s100, %s114
      %p116 = scmp.eq.s32.totalorder %s27, 0
      %p117 = por %p115, %p116
      %s119 = sadd.s32 %s118, 1
      %p122 = scmp.eq.s32.totalorder %s21, 1
      %p123 = scmp.ne.s32.totalorder %s118, %s120
      %p124 = scmp.eq.s32.totalorder %s21, 0
      %p125 = por %p123, %p124
      %p126 = scmp.ne.s32.totalorder %s118, %s120
      %p127 = scmp.eq.s32.totalorder %s26, 1
      %p128 = por %p126, %p127
      %p129 = scmp.ne.s32.totalorder %s120, %s121
      %p130 = scmp.eq.s32.totalorder %s26, 0
      %p131 = por %p129, %p130
      %p132 = scmp.ne.s32.totalorder %s120, %s121
      %p133 = scmp.eq.s32.totalorder %s27, 1
      %p134 = por %p132, %p133
      %p136 = scmp.ne.s32.totalorder %s121, %s135
      %p137 = scmp.eq.s32.totalorder %s27, 0
      %p138 = por %p136, %p137
      %s140 = sadd.s32 %s139, 1
      %p143 = scmp.eq.s32.totalorder %s21, 1
      %p144 = scmp.ne.s32.totalorder %s139, %s141
      %p145 = scmp.eq.s32.totalorder %s21, 0
      %p146 = por %p144, %p145
      %p147 = scmp.ne.s32.totalorder %s139, %s141
      %p148 = scmp.eq.s32.totalorder %s26, 1
      %p149 = por %p147, %p148
      %p150 = scmp.ne.s32.totalorder %s141, %s142
      %p151 = scmp.eq.s32.totalorder %s26, 0
      %p152 = por %p150, %p151
      %p153 = scmp.ne.s32.totalorder %s141, %s142
      %p154 = scmp.eq.s32.totalorder %s27, 1
      %p155 = por %p153, %p154
      %p157 = scmp.ne.s32.totalorder %s142, %s156
      %p158 = scmp.eq.s32.totalorder %s27, 0
      %p159 = por %p157, %p158
      %s161 = sadd.s32 %s160, 1
      %p164 = scmp.eq.s32.totalorder %s21, 1
      %p165 = scmp.ne.s32.totalorder %s160, %s162
      %p166 = scmp.eq.s32.totalorder %s21, 0
      %p167 = por %p165, %p166
      %p168 = scmp.ne.s32.totalorder %s160, %s162
      %p169 = scmp.eq.s32.totalorder %s26, 1
      %p170 = por %p168, %p169
      %p171 = scmp.ne.s32.totalorder %s162, %s163
      %p172 = scmp.eq.s32.totalorder %s26, 0
      %p173 = por %p171, %p172
      %p174 = scmp.ne.s32.totalorder %s162, %s163
      %p175 = scmp.eq.s32.totalorder %s27, 1
      %p176 = por %p174, %p175
      %p178 = scmp.ne.s32.totalorder %s163, %s177
      %p179 = scmp.eq.s32.totalorder %s27, 0
      %p180 = por %p178, %p179
      %s181 = ssub.s32 %s21, %s28
      %p182 = scmp.eq.s32.totalorder %s181, 0
      %s184 = sadd.s32 %s183, 1
      %s185 = scalar_select %p182, %s183, %s184
      %p188 = pneg %p182
      %p189 = scmp.eq.s32.totalorder %s21, 1
      %p190 = por %p188, %p189
      %p191 = scmp.ne.s32.totalorder %s183, %s186
      %p192 = scmp.eq.s32.totalorder %s21, 0
      %p193 = por %p191, %p192
      %p194 = scmp.ne.s32.totalorder %s183, %s186
      %p195 = scmp.eq.s32.totalorder %s26, 1
      %p196 = por %p194, %p195
      %p197 = scmp.ne.s32.totalorder %s186, %s187
      %p198 = scmp.eq.s32.totalorder %s26, 0
      %p199 = por %p197, %p198
      %p200 = scmp.ne.s32.totalorder %s186, %s187
      %p201 = scmp.eq.s32.totalorder %s27, 1
      %p202 = por %p200, %p201
      %p204 = scmp.ne.s32.totalorder %s187, %s203
      %p205 = scmp.eq.s32.totalorder %s27, 0
      %p206 = por %p204, %p205
      %p207 = scmp.le.s32.totalorder 1, %s21
      %p208 = scmp.lt.s32.totalorder %s21, 3
      %p209 = pnand %p207, %p208
      %p210 = pneg %p209
      // Predicated region
      $region9: #{_lambda_.1} parent=5 // pred_check
        _
      $region10: #{_lambda_.1} parent=5 // pred_check_branch
        %212 = sbr.rel (%p209) target = $region12
      $region11: #{_lambda_.1} parent=5 // pred_region
        %s213 = ssub.s32 %s21, 1
        // Predicated region
        $region13: #{_lambda_.1} parent=11 // pred_check
          %p214 = pneg %p68
        $region14: #{_lambda_.1} parent=11 // pred_check_branch
          %216 = sbr.rel (%p214) target = $region16
        $region15: #{_lambda_.1} parent=11 // pred_region
          _
        $region16: #{_lambda_.1} parent=11 // pred_fallthru
          _
        // Predicated region
        $region17: #{_lambda_.1} parent=11 // pred_check
          %p217 = pneg %p89
        $region18: #{_lambda_.1} parent=11 // pred_check_branch
          %219 = sbr.rel (%p217) target = $region20
        $region19: #{_lambda_.1} parent=11 // pred_region
          _
        $region20: #{_lambda_.1} parent=11 // pred_fallthru
          _
        // Predicated region
        $region21: #{_lambda_.1} parent=11 // pred_check
          %p220 = pneg %p110
        $region22: #{_lambda_.1} parent=11 // pred_check_branch
          %222 = sbr.rel (%p220) target = $region24
        $region23: #{_lambda_.1} parent=11 // pred_region
          %224 = vsyncadd [#allocation6], 0
          %s225 = sshll.u32 %s3, 4
          %s226 = int_to_ptr.hbm [resolvable:$true] %s225
          %s227 = sshll.u32 [#allocation5], 4
          %s228 = int_to_ptr.vmem [resolvable:$true] %s227
          %233 = dma.hbm_to_vmem [thread:$0]  %s226, 2048, %s228, [#allocation6], 128, 128, 8
        $region24: #{_lambda_.1} parent=11 // pred_fallthru
          _
        // Predicated region
        $region25: #{_lambda_.1} parent=11 // pred_check
          %p234 = pneg %p131
        $region26: #{_lambda_.1} parent=11 // pred_check_branch
          %236 = sbr.rel (%p234) target = $region28
        $region27: #{_lambda_.1} parent=11 // pred_region
          _
        $region28: #{_lambda_.1} parent=11 // pred_fallthru
          _
        // Predicated region
        $region29: #{_lambda_.1} parent=11 // pred_check
          %p237 = pneg %p152
        $region30: #{_lambda_.1} parent=11 // pred_check_branch
          %239 = sbr.rel (%p237) target = $region32
        $region31: #{_lambda_.1} parent=11 // pred_region
          %241 = vsyncadd [#allocation6], 0
          %s242 = sshll.u32 %s5, 4
          %s243 = int_to_ptr.hbm [resolvable:$true] %s242
          %s244 = sshll.u32 [#allocation7], 4
          %s245 = int_to_ptr.vmem [resolvable:$true] %s244
          %250 = dma.hbm_to_vmem [thread:$0]  %s243, 2048, %s245, [#allocation6], 64, 64, 4
        $region32: #{_lambda_.1} parent=11 // pred_fallthru
          _
        // Predicated region
        $region33: #{_lambda_.1} parent=11 // pred_check
          %p251 = pneg %p173
        $region34: #{_lambda_.1} parent=11 // pred_check_branch
          %253 = sbr.rel (%p251) target = $region36
        $region35: #{_lambda_.1} parent=11 // pred_region
          %255 = vsyncadd [#allocation9], 0
          %s257 = sshll.u32 %s6, 4
          %s258 = int_to_ptr.hbm [resolvable:$true] %s257
          %s259 = sshll.u32 [#allocation8], 4
          %s260 = int_to_ptr.vmem [resolvable:$true] %s259
          %262 = dma.hbm_to_vmem [thread:$0]  %s258, 16, %s260, [#allocation9]
        $region36: #{_lambda_.1} parent=11 // pred_fallthru
          _
      $region12: #{_lambda_.1} parent=5 // pred_fallthru
        _
      %p263 = scmp.lt.s32.totalorder %s21, 2
      // Predicated region
      $region37: #{_lambda_.1} parent=5 // pred_check
        %p264 = pneg %p263
      $region38: #{_lambda_.1} parent=5 // pred_check_branch
        %266 = sbr.rel (%p264) target = $region40
      $region39: #{_lambda_.1} parent=5 // pred_region
        // Predicated region
        $region41: #{_lambda_.1} parent=39 // pred_check
          %p267 = pneg %p41
        $region42: #{_lambda_.1} parent=39 // pred_check_branch
          %269 = sbr.rel (%p267) target = $region44
        $region43: #{_lambda_.1} parent=39 // pred_region
          %s270 = sand.u32 %s31, 1
          %s271 = scalar_lea.sflag [#allocation3], %s270
          %s272 = sand.u32 %s31, 1
          %s273 = smul.addr %s272, 256
          %s274 = scalar_lea.vmem [#allocation2], %s273
          %s275 = smul.u32 32, %s21
          %277 = vsyncadd %s271, 0
          %s278 = smul.addr %s275, 8
          %s279 = scalar_lea.hbm %s0, %s278
          %s280 = sshll.u32 %s279, 4
          %s281 = int_to_ptr.hbm [resolvable:$true] %s280
          %s282 = sshll.u32 %s274, 4
          %s283 = int_to_ptr.vmem [resolvable:$true] %s282
          %288 = dma.hbm_to_vmem [thread:$0]  %s281, 4096, %s283, %s271, 128, 128, 8
        $region44: #{_lambda_.1} parent=39 // pred_fallthru
          _
      $region40: #{_lambda_.1} parent=5 // pred_fallthru
        _
      %p289 = scmp.le.s32.totalorder 1, %s21
      %p290 = scmp.lt.s32.totalorder %s21, 3
      %p291 = pnand %p289, %p290
      %p292 = pneg %p291
      // Predicated region
      $region45: #{_lambda_.1} parent=5 // pred_check
        _
      $region46: #{_lambda_.1} parent=5 // pred_check_branch
        %294 = sbr.rel (%p291) target = $region48
      $region47: #{_lambda_.1} parent=5 // pred_region
        %s295 = ssub.s32 %s21, 1
        %s296 = sand.u32 %s34, 1
        %s297 = scalar_lea.sflag [#allocation3], %s296
        %s298 = sand.u32 %s34, 1
        %s299 = smul.addr %s298, 256
        %s300 = scalar_lea.vmem [#allocation2], %s299
        // Predicated region
        $region49: #{_lambda_.1} parent=47 // pred_check
          %p301 = pneg %p47
        $region50: #{_lambda_.1} parent=47 // pred_check_branch
          %303 = sbr.rel (%p301) target = $region52
        $region51: #{_lambda_.1} parent=47 // pred_region
          %305 = dma.done %s297, 4096
        $region52: #{_lambda_.1} parent=47 // pred_fallthru
          _
        // Predicated region
        $region53: #{_lambda_.1} parent=47 // pred_check
          %p306 = pneg %p110
        $region54: #{_lambda_.1} parent=47 // pred_check_branch
          %308 = sbr.rel (%p306) target = $region56
        $region55: #{_lambda_.1} parent=47 // pred_region
          %310 = dma.done [#allocation6], 2048
        $region56: #{_lambda_.1} parent=47 // pred_fallthru
          _
        // Predicated region
        $region57: #{_lambda_.1} parent=47 // pred_check
          %p311 = pneg %p152
        $region58: #{_lambda_.1} parent=47 // pred_check_branch
          %313 = sbr.rel (%p311) target = $region60
        $region59: #{_lambda_.1} parent=47 // pred_region
          %315 = dma.done [#allocation6], 2048
        $region60: #{_lambda_.1} parent=47 // pred_fallthru
          _
        // Predicated region
        $region61: #{_lambda_.1} parent=47 // pred_check
          %p316 = pneg %p173
        $region62: #{_lambda_.1} parent=47 // pred_check_branch
          %318 = sbr.rel (%p316) target = $region64
        $region63: #{_lambda_.1} parent=47 // pred_region
          %320 = dma.done [#allocation9], 16
        $region64: #{_lambda_.1} parent=47 // pred_fallthru
          _
        %s321 = sand.u32 %s34, 1
        %s322 = scalar_lea.sflag [#allocation3], %s321
        %s323 = sand.u32 %s34, 1
        %s324 = smul.addr %s323, 256
        %s325 = scalar_lea.vmem [#allocation2], %s324
        %p326 = pneg %p47
        %p327 = pneg %p44
        %p328 = pneg %p68
        %p329 = pneg %p65
        %p330 = pneg %p89
        %p331 = pneg %p86
        %p332 = pneg %p110
        %p333 = pneg %p107
        %p334 = pneg %p131
        %p335 = pneg %p128
        %p336 = pneg %p152
        %p337 = pneg %p149
        %p338 = pneg %p173
        %p339 = pneg %p170
        %p340 = pneg %p199
        %p341 = pneg %p196
        %s342 = sand.u32 %s186, 1
        %s343 = scalar_lea.sflag [#allocation4], %s342
        %s344 = sand.u32 %s186, 1
        %s345 = smul.addr %s344, 256
        %s346 = scalar_lea.vmem [#allocation10], %s345
        %s347 = smul.u32 32, %s26
        %s348 = smul.u32 32, %s26
        %v349 = vld [vmem:[%s300] sm:$0xff]
        %v350 = vld [vmem:[%s300 + $0x8] sm:$0xff]
        %v351 = vld [vmem:[%s300 + $0x10] sm:$0xff]
        %v352 = vld [vmem:[%s300 + $0x18] sm:$0xff]
        %v353 = vld [vmem:[%s300 + $0x20] sm:$0xff]
        %v354 = vld [vmem:[%s300 + $0x28] sm:$0xff]
        %v355 = vld [vmem:[%s300 + $0x30] sm:$0xff]
        %v356 = vld [vmem:[%s300 + $0x38] sm:$0xff]
        %v357 = vld [vmem:[%s300 + $0x40] sm:$0xff]
        %v358 = vld [vmem:[%s300 + $0x48] sm:$0xff]
        %v359 = vld [vmem:[%s300 + $0x50] sm:$0xff]
        %v360 = vld [vmem:[%s300 + $0x58] sm:$0xff]
        %v361 = vld [vmem:[%s300 + $0x60] sm:$0xff]
        %v362 = vld [vmem:[%s300 + $0x68] sm:$0xff]
        %v363 = vld [vmem:[%s300 + $0x70] sm:$0xff]
        %v364 = vld [vmem:[%s300 + $0x78] sm:$0xff]
        %v365 = vld [vmem:[%s300 + $0x80] sm:$0xff]
        %v366 = vld [vmem:[%s300 + $0x88] sm:$0xff]
        %v367 = vld [vmem:[%s300 + $0x90] sm:$0xff]
        %v368 = vld [vmem:[%s300 + $0x98] sm:$0xff]
        %v369 = vld [vmem:[%s300 + $0xa0] sm:$0xff]
        %v370 = vld [vmem:[%s300 + $0xa8] sm:$0xff]
        %v371 = vld [vmem:[%s300 + $0xb0] sm:$0xff]
        %v372 = vld [vmem:[%s300 + $0xb8] sm:$0xff]
        %v373 = vld [vmem:[%s300 + $0xc0] sm:$0xff]
        %v374 = vld [vmem:[%s300 + $0xc8] sm:$0xff]
        %v375 = vld [vmem:[%s300 + $0xd0] sm:$0xff]
        %v376 = vld [vmem:[%s300 + $0xd8] sm:$0xff]
        %v377 = vld [vmem:[%s300 + $0xe0] sm:$0xff]
        %v378 = vld [vmem:[%s300 + $0xe8] sm:$0xff]
        %v379 = vld [vmem:[%s300 + $0xf0] sm:$0xff]
        %v380 = vld [vmem:[%s300 + $0xf8] sm:$0xff]
        %381 = vadd.xlane.f32.xlu0 %v349
        %v382 = vpop.xlane.xlu0 %381
        %383 = vadd.xlane.f32.xlu0 %v350
        %v384 = vpop.xlane.xlu0 %383
        %385 = vadd.xlane.f32.xlu0 %v351
        %v386 = vpop.xlane.xlu0 %385
        %387 = vadd.xlane.f32.xlu0 %v352
        %v388 = vpop.xlane.xlu0 %387
        %389 = vadd.xlane.f32.xlu0 %v353
        %v390 = vpop.xlane.xlu0 %389
        %391 = vadd.xlane.f32.xlu0 %v354
        %v392 = vpop.xlane.xlu0 %391
        %393 = vadd.xlane.f32.xlu0 %v355
        %v394 = vpop.xlane.xlu0 %393
        %395 = vadd.xlane.f32.xlu0 %v356
        %v396 = vpop.xlane.xlu0 %395
        %397 = vadd.xlane.f32.xlu0 %v357
        %v398 = vpop.xlane.xlu0 %397
        %399 = vadd.xlane.f32.xlu0 %v358
        %v400 = vpop.xlane.xlu0 %399
        %401 = vadd.xlane.f32.xlu0 %v359
        %v402 = vpop.xlane.xlu0 %401
        %403 = vadd.xlane.f32.xlu0 %v360
        %v404 = vpop.xlane.xlu0 %403
        %405 = vadd.xlane.f32.xlu0 %v361
        %v406 = vpop.xlane.xlu0 %405
        %407 = vadd.xlane.f32.xlu0 %v362
        %v408 = vpop.xlane.xlu0 %407
        %409 = vadd.xlane.f32.xlu0 %v363
        %v410 = vpop.xlane.xlu0 %409
        %411 = vadd.xlane.f32.xlu0 %v364
        %v412 = vpop.xlane.xlu0 %411
        %413 = vadd.xlane.f32.xlu0 %v365
        %v414 = vpop.xlane.xlu0 %413
        %415 = vadd.xlane.f32.xlu0 %v366
        %v416 = vpop.xlane.xlu0 %415
        %417 = vadd.xlane.f32.xlu0 %v367
        %v418 = vpop.xlane.xlu0 %417
        %419 = vadd.xlane.f32.xlu0 %v368
        %v420 = vpop.xlane.xlu0 %419
        %421 = vadd.xlane.f32.xlu0 %v369
        %v422 = vpop.xlane.xlu0 %421
        %423 = vadd.xlane.f32.xlu0 %v370
        %v424 = vpop.xlane.xlu0 %423
        %425 = vadd.xlane.f32.xlu0 %v371
        %v426 = vpop.xlane.xlu0 %425
        %427 = vadd.xlane.f32.xlu0 %v372
        %v428 = vpop.xlane.xlu0 %427
        %429 = vadd.xlane.f32.xlu0 %v373
        %v430 = vpop.xlane.xlu0 %429
        %431 = vadd.xlane.f32.xlu0 %v374
        %v432 = vpop.xlane.xlu0 %431
        %433 = vadd.xlane.f32.xlu0 %v375
        %v434 = vpop.xlane.xlu0 %433
        %435 = vadd.xlane.f32.xlu0 %v376
        %v436 = vpop.xlane.xlu0 %435
        %437 = vadd.xlane.f32.xlu0 %v377
        %v438 = vpop.xlane.xlu0 %437
        %439 = vadd.xlane.f32.xlu0 %v378
        %v440 = vpop.xlane.xlu0 %439
        %441 = vadd.xlane.f32.xlu0 %v379
        %v442 = vpop.xlane.xlu0 %441
        %443 = vadd.xlane.f32.xlu0 %v380
        %v444 = vpop.xlane.xlu0 %443
        %v445 = vrcp.pop 128.0
        %v446 = vmul.f32 128.0, %v445
        %v447 = vsub.f32 1.0, %v446
        %v448 = vmul.f32 %v445, %v447
        %v449 = vadd.f32 %v445, %v448
        %vm450 = vweird.f32 %v445
        %v451 = vsel %vm450, %v445, %v449
        %v452 = vmul.f32 %v382, %v451
        %v453 = vmul.f32 %v384, %v451
        %v454 = vmul.f32 %v386, %v451
        %v455 = vmul.f32 %v388, %v451
        %v456 = vmul.f32 %v390, %v451
        %v457 = vmul.f32 %v392, %v451
        %v458 = vmul.f32 %v394, %v451
        %v459 = vmul.f32 %v396, %v451
        %v460 = vmul.f32 %v398, %v451
        %v461 = vmul.f32 %v400, %v451
        %v462 = vmul.f32 %v402, %v451
        %v463 = vmul.f32 %v404, %v451
        %v464 = vmul.f32 %v406, %v451
        %v465 = vmul.f32 %v408, %v451
        %v466 = vmul.f32 %v410, %v451
        %v467 = vmul.f32 %v412, %v451
        %v468 = vmul.f32 %v414, %v451
        %v469 = vmul.f32 %v416, %v451
        %v470 = vmul.f32 %v418, %v451
        %v471 = vmul.f32 %v420, %v451
        %v472 = vmul.f32 %v422, %v451
        %v473 = vmul.f32 %v424, %v451
        %v474 = vmul.f32 %v426, %v451
        %v475 = vmul.f32 %v428, %v451
        %v476 = vmul.f32 %v430, %v451
        %v477 = vmul.f32 %v432, %v451
        %v478 = vmul.f32 %v434, %v451
        %v479 = vmul.f32 %v436, %v451
        %v480 = vmul.f32 %v438, %v451
        %v481 = vmul.f32 %v440, %v451
        %v482 = vmul.f32 %v442, %v451
        %v483 = vmul.f32 %v444, %v451
        %v484 = vsub.f32 %v349, %v452
        %v485 = vsub.f32 %v350, %v453
        %v486 = vsub.f32 %v351, %v454
        %v487 = vsub.f32 %v352, %v455
        %v488 = vsub.f32 %v353, %v456
        %v489 = vsub.f32 %v354, %v457
        %v490 = vsub.f32 %v355, %v458
        %v491 = vsub.f32 %v356, %v459
        %v492 = vsub.f32 %v357, %v460
        %v493 = vsub.f32 %v358, %v461
        %v494 = vsub.f32 %v359, %v462
        %v495 = vsub.f32 %v360, %v463
        %v496 = vsub.f32 %v361, %v464
        %v497 = vsub.f32 %v362, %v465
        %v498 = vsub.f32 %v363, %v466
        %v499 = vsub.f32 %v364, %v467
        %v500 = vsub.f32 %v365, %v468
        %v501 = vsub.f32 %v366, %v469
        %v502 = vsub.f32 %v367, %v470
        %v503 = vsub.f32 %v368, %v471
        %v504 = vsub.f32 %v369, %v472
        %v505 = vsub.f32 %v370, %v473
        %v506 = vsub.f32 %v371, %v474
        %v507 = vsub.f32 %v372, %v475
        %v508 = vsub.f32 %v373, %v476
        %v509 = vsub.f32 %v374, %v477
        %v510 = vsub.f32 %v375, %v478
        %v511 = vsub.f32 %v376, %v479
        %v512 = vsub.f32 %v377, %v480
        %v513 = vsub.f32 %v378, %v481
        %v514 = vsub.f32 %v379, %v482
        %v515 = vsub.f32 %v380, %v483
        %v516 = vmul.f32 %v484, %v484
        %v517 = vmul.f32 %v485, %v485
        %v518 = vmul.f32 %v486, %v486
        %v519 = vmul.f32 %v487, %v487
        %v520 = vmul.f32 %v488, %v488
        %v521 = vmul.f32 %v489, %v489
        %v522 = vmul.f32 %v490, %v490
        %v523 = vmul.f32 %v491, %v491
        %v524 = vmul.f32 %v492, %v492
        %v525 = vmul.f32 %v493, %v493
        %v526 = vmul.f32 %v494, %v494
        %v527 = vmul.f32 %v495, %v495
        %v528 = vmul.f32 %v496, %v496
        %v529 = vmul.f32 %v497, %v497
        %v530 = vmul.f32 %v498, %v498
        %v531 = vmul.f32 %v499, %v499
        %v532 = vmul.f32 %v500, %v500
        %v533 = vmul.f32 %v501, %v501
        %v534 = vmul.f32 %v502, %v502
        %v535 = vmul.f32 %v503, %v503
        %v536 = vmul.f32 %v504, %v504
        %v537 = vmul.f32 %v505, %v505
        %v538 = vmul.f32 %v506, %v506
        %v539 = vmul.f32 %v507, %v507
        %v540 = vmul.f32 %v508, %v508
        %v541 = vmul.f32 %v509, %v509
        %v542 = vmul.f32 %v510, %v510
        %v543 = vmul.f32 %v511, %v511
        %v544 = vmul.f32 %v512, %v512
        %v545 = vmul.f32 %v513, %v513
        %v546 = vmul.f32 %v514, %v514
        %v547 = vmul.f32 %v515, %v515
        %548 = vadd.xlane.f32.xlu0 %v516
        %v549 = vpop.xlane.xlu0 %548
        %550 = vadd.xlane.f32.xlu0 %v517
        %v551 = vpop.xlane.xlu0 %550
        %552 = vadd.xlane.f32.xlu0 %v518
        %v553 = vpop.xlane.xlu0 %552
        %554 = vadd.xlane.f32.xlu0 %v519
        %v555 = vpop.xlane.xlu0 %554
        %556 = vadd.xlane.f32.xlu0 %v520
        %v557 = vpop.xlane.xlu0 %556
        %558 = vadd.xlane.f32.xlu0 %v521
        %v559 = vpop.xlane.xlu0 %558
        %560 = vadd.xlane.f32.xlu0 %v522
        %v561 = vpop.xlane.xlu0 %560
        %562 = vadd.xlane.f32.xlu0 %v523
        %v563 = vpop.xlane.xlu0 %562
        %564 = vadd.xlane.f32.xlu0 %v524
        %v565 = vpop.xlane.xlu0 %564
        %566 = vadd.xlane.f32.xlu0 %v525
        %v567 = vpop.xlane.xlu0 %566
        %568 = vadd.xlane.f32.xlu0 %v526
        %v569 = vpop.xlane.xlu0 %568
        %570 = vadd.xlane.f32.xlu0 %v527
        %v571 = vpop.xlane.xlu0 %570
        %572 = vadd.xlane.f32.xlu0 %v528
        %v573 = vpop.xlane.xlu0 %572
        %574 = vadd.xlane.f32.xlu0 %v529
        %v575 = vpop.xlane.xlu0 %574
        %576 = vadd.xlane.f32.xlu0 %v530
        %v577 = vpop.xlane.xlu0 %576
        %578 = vadd.xlane.f32.xlu0 %v531
        %v579 = vpop.xlane.xlu0 %578
        %580 = vadd.xlane.f32.xlu0 %v532
        %v581 = vpop.xlane.xlu0 %580
        %582 = vadd.xlane.f32.xlu0 %v533
        %v583 = vpop.xlane.xlu0 %582
        %584 = vadd.xlane.f32.xlu0 %v534
        %v585 = vpop.xlane.xlu0 %584
        %586 = vadd.xlane.f32.xlu0 %v535
        %v587 = vpop.xlane.xlu0 %586
        %588 = vadd.xlane.f32.xlu0 %v536
        %v589 = vpop.xlane.xlu0 %588
        %590 = vadd.xlane.f32.xlu0 %v537
        %v591 = vpop.xlane.xlu0 %590
        %592 = vadd.xlane.f32.xlu0 %v538
        %v593 = vpop.xlane.xlu0 %592
        %594 = vadd.xlane.f32.xlu0 %v539
        %v595 = vpop.xlane.xlu0 %594
        %596 = vadd.xlane.f32.xlu0 %v540
        %v597 = vpop.xlane.xlu0 %596
        %598 = vadd.xlane.f32.xlu0 %v541
        %v599 = vpop.xlane.xlu0 %598
        %600 = vadd.xlane.f32.xlu0 %v542
        %v601 = vpop.xlane.xlu0 %600
        %602 = vadd.xlane.f32.xlu0 %v543
        %v603 = vpop.xlane.xlu0 %602
        %604 = vadd.xlane.f32.xlu0 %v544
        %v605 = vpop.xlane.xlu0 %604
        %606 = vadd.xlane.f32.xlu0 %v545
        %v607 = vpop.xlane.xlu0 %606
        %608 = vadd.xlane.f32.xlu0 %v546
        %v609 = vpop.xlane.xlu0 %608
        %610 = vadd.xlane.f32.xlu0 %v547
        %v611 = vpop.xlane.xlu0 %610
        %v612 = vmul.f32 %v549, %v451
        %v613 = vmul.f32 %v551, %v451
        %v614 = vmul.f32 %v553, %v451
        %v615 = vmul.f32 %v555, %v451
        %v616 = vmul.f32 %v557, %v451
        %v617 = vmul.f32 %v559, %v451
        %v618 = vmul.f32 %v561, %v451
        %v619 = vmul.f32 %v563, %v451
        %v620 = vmul.f32 %v565, %v451
        %v621 = vmul.f32 %v567, %v451
        %v622 = vmul.f32 %v569, %v451
        %v623 = vmul.f32 %v571, %v451
        %v624 = vmul.f32 %v573, %v451
        %v625 = vmul.f32 %v575, %v451
        %v626 = vmul.f32 %v577, %v451
        %v627 = vmul.f32 %v579, %v451
        %v628 = vmul.f32 %v581, %v451
        %v629 = vmul.f32 %v583, %v451
        %v630 = vmul.f32 %v585, %v451
        %v631 = vmul.f32 %v587, %v451
        %v632 = vmul.f32 %v589, %v451
        %v633 = vmul.f32 %v591, %v451
        %v634 = vmul.f32 %v593, %v451
        %v635 = vmul.f32 %v595, %v451
        %v636 = vmul.f32 %v597, %v451
        %v637 = vmul.f32 %v599, %v451
        %v638 = vmul.f32 %v601, %v451
        %v639 = vmul.f32 %v603, %v451
        %v640 = vmul.f32 %v605, %v451
        %v641 = vmul.f32 %v607, %v451
        %v642 = vmul.f32 %v609, %v451
        %v643 = vmul.f32 %v611, %v451
        %v644 = vrsqrt.pop %v612
        %v645 = vmul.f32 %v644, %v612
        %v646 = vmul.f32 %v645, %v644
        %v647 = vmul.f32 0.5, %v646
        %v648 = vsub.f32 1.5, %v647
        %v649 = vmul.f32 %v644, %v648
        %v650 = vmul.f32 %v612, %v649
        %vm651 = vcmp.eq.f32.partialorder %v612, inf
        %v652 = vsel %vm651, %v612, %v650
        %vm653 = vcmp.eq.f32.partialorder %v612, 0.0
        %v654 = vand.u32 %v612, 2147483648
        %v655 = vsel %vm653, %v654, %v652
        %v656 = vrsqrt.pop %v613
        %v657 = vmul.f32 %v656, %v613
        %v658 = vmul.f32 %v657, %v656
        %v659 = vmul.f32 0.5, %v658
        %v660 = vsub.f32 1.5, %v659
        %v661 = vmul.f32 %v656, %v660
        %v662 = vmul.f32 %v613, %v661
        %vm663 = vcmp.eq.f32.partialorder %v613, inf
        %v664 = vsel %vm663, %v613, %v662
        %vm665 = vcmp.eq.f32.partialorder %v613, 0.0
        %v666 = vand.u32 %v613, 2147483648
        %v667 = vsel %vm665, %v666, %v664
        %v668 = vrsqrt.pop %v614
        %v669 = vmul.f32 %v668, %v614
        %v670 = vmul.f32 %v669, %v668
        %v671 = vmul.f32 0.5, %v670
        %v672 = vsub.f32 1.5, %v671
        %v673 = vmul.f32 %v668, %v672
        %v674 = vmul.f32 %v614, %v673
        %vm675 = vcmp.eq.f32.partialorder %v614, inf
        %v676 = vsel %vm675, %v614, %v674
        %vm677 = vcmp.eq.f32.partialorder %v614, 0.0
        %v678 = vand.u32 %v614, 2147483648
        %v679 = vsel %vm677, %v678, %v676
        %v680 = vrsqrt.pop %v615
        %v681 = vmul.f32 %v680, %v615
        %v682 = vmul.f32 %v681, %v680
        %v683 = vmul.f32 0.5, %v682
        %v684 = vsub.f32 1.5, %v683
        %v685 = vmul.f32 %v680, %v684
        %v686 = vmul.f32 %v615, %v685
        %vm687 = vcmp.eq.f32.partialorder %v615, inf
        %v688 = vsel %vm687, %v615, %v686
        %vm689 = vcmp.eq.f32.partialorder %v615, 0.0
        %v690 = vand.u32 %v615, 2147483648
        %v691 = vsel %vm689, %v690, %v688
        %v692 = vrsqrt.pop %v616
        %v693 = vmul.f32 %v692, %v616
        %v694 = vmul.f32 %v693, %v692
        %v695 = vmul.f32 0.5, %v694
        %v696 = vsub.f32 1.5, %v695
        %v697 = vmul.f32 %v692, %v696
        %v698 = vmul.f32 %v616, %v697
        %vm699 = vcmp.eq.f32.partialorder %v616, inf
        %v700 = vsel %vm699, %v616, %v698
        %vm701 = vcmp.eq.f32.partialorder %v616, 0.0
        %v702 = vand.u32 %v616, 2147483648
        %v703 = vsel %vm701, %v702, %v700
        %v704 = vrsqrt.pop %v617
        %v705 = vmul.f32 %v704, %v617
        %v706 = vmul.f32 %v705, %v704
        %v707 = vmul.f32 0.5, %v706
        %v708 = vsub.f32 1.5, %v707
        %v709 = vmul.f32 %v704, %v708
        %v710 = vmul.f32 %v617, %v709
        %vm711 = vcmp.eq.f32.partialorder %v617, inf
        %v712 = vsel %vm711, %v617, %v710
        %vm713 = vcmp.eq.f32.partialorder %v617, 0.0
        %v714 = vand.u32 %v617, 2147483648
        %v715 = vsel %vm713, %v714, %v712
        %v716 = vrsqrt.pop %v618
        %v717 = vmul.f32 %v716, %v618
        %v718 = vmul.f32 %v717, %v716
        %v719 = vmul.f32 0.5, %v718
        %v720 = vsub.f32 1.5, %v719
        %v721 = vmul.f32 %v716, %v720
        %v722 = vmul.f32 %v618, %v721
        %vm723 = vcmp.eq.f32.partialorder %v618, inf
        %v724 = vsel %vm723, %v618, %v722
        %vm725 = vcmp.eq.f32.partialorder %v618, 0.0
        %v726 = vand.u32 %v618, 2147483648
        %v727 = vsel %vm725, %v726, %v724
        %v728 = vrsqrt.pop %v619
        %v729 = vmul.f32 %v728, %v619
        %v730 = vmul.f32 %v729, %v728
        %v731 = vmul.f32 0.5, %v730
        %v732 = vsub.f32 1.5, %v731
        %v733 = vmul.f32 %v728, %v732
        %v734 = vmul.f32 %v619, %v733
        %vm735 = vcmp.eq.f32.partialorder %v619, inf
        %v736 = vsel %vm735, %v619, %v734
        %vm737 = vcmp.eq.f32.partialorder %v619, 0.0
        %v738 = vand.u32 %v619, 2147483648
        %v739 = vsel %vm737, %v738, %v736
        %v740 = vrsqrt.pop %v620
        %v741 = vmul.f32 %v740, %v620
        %v742 = vmul.f32 %v741, %v740
        %v743 = vmul.f32 0.5, %v742
        %v744 = vsub.f32 1.5, %v743
        %v745 = vmul.f32 %v740, %v744
        %v746 = vmul.f32 %v620, %v745
        %vm747 = vcmp.eq.f32.partialorder %v620, inf
        %v748 = vsel %vm747, %v620, %v746
        %vm749 = vcmp.eq.f32.partialorder %v620, 0.0
        %v750 = vand.u32 %v620, 2147483648
        %v751 = vsel %vm749, %v750, %v748
        %v752 = vrsqrt.pop %v621
        %v753 = vmul.f32 %v752, %v621
        %v754 = vmul.f32 %v753, %v752
        %v755 = vmul.f32 0.5, %v754
        %v756 = vsub.f32 1.5, %v755
        %v757 = vmul.f32 %v752, %v756
        %v758 = vmul.f32 %v621, %v757
        %vm759 = vcmp.eq.f32.partialorder %v621, inf
        %v760 = vsel %vm759, %v621, %v758
        %vm761 = vcmp.eq.f32.partialorder %v621, 0.0
        %v762 = vand.u32 %v621, 2147483648
        %v763 = vsel %vm761, %v762, %v760
        %v764 = vrsqrt.pop %v622
        %v765 = vmul.f32 %v764, %v622
        %v766 = vmul.f32 %v765, %v764
        %v767 = vmul.f32 0.5, %v766
        %v768 = vsub.f32 1.5, %v767
        %v769 = vmul.f32 %v764, %v768
        %v770 = vmul.f32 %v622, %v769
        %vm771 = vcmp.eq.f32.partialorder %v622, inf
        %v772 = vsel %vm771, %v622, %v770
        %vm773 = vcmp.eq.f32.partialorder %v622, 0.0
        %v774 = vand.u32 %v622, 2147483648
        %v775 = vsel %vm773, %v774, %v772
        %v776 = vrsqrt.pop %v623
        %v777 = vmul.f32 %v776, %v623
        %v778 = vmul.f32 %v777, %v776
        %v779 = vmul.f32 0.5, %v778
        %v780 = vsub.f32 1.5, %v779
        %v781 = vmul.f32 %v776, %v780
        %v782 = vmul.f32 %v623, %v781
        %vm783 = vcmp.eq.f32.partialorder %v623, inf
        %v784 = vsel %vm783, %v623, %v782
        %vm785 = vcmp.eq.f32.partialorder %v623, 0.0
        %v786 = vand.u32 %v623, 2147483648
        %v787 = vsel %vm785, %v786, %v784
        %v788 = vrsqrt.pop %v624
        %v789 = vmul.f32 %v788, %v624
        %v790 = vmul.f32 %v789, %v788
        %v791 = vmul.f32 0.5, %v790
        %v792 = vsub.f32 1.5, %v791
        %v793 = vmul.f32 %v788, %v792
        %v794 = vmul.f32 %v624, %v793
        %vm795 = vcmp.eq.f32.partialorder %v624, inf
        %v796 = vsel %vm795, %v624, %v794
        %vm797 = vcmp.eq.f32.partialorder %v624, 0.0
        %v798 = vand.u32 %v624, 2147483648
        %v799 = vsel %vm797, %v798, %v796
        %v800 = vrsqrt.pop %v625
        %v801 = vmul.f32 %v800, %v625
        %v802 = vmul.f32 %v801, %v800
        %v803 = vmul.f32 0.5, %v802
        %v804 = vsub.f32 1.5, %v803
        %v805 = vmul.f32 %v800, %v804
        %v806 = vmul.f32 %v625, %v805
        %vm807 = vcmp.eq.f32.partialorder %v625, inf
        %v808 = vsel %vm807, %v625, %v806
        %vm809 = vcmp.eq.f32.partialorder %v625, 0.0
        %v810 = vand.u32 %v625, 2147483648
        %v811 = vsel %vm809, %v810, %v808
        %v812 = vrsqrt.pop %v626
        %v813 = vmul.f32 %v812, %v626
        %v814 = vmul.f32 %v813, %v812
        %v815 = vmul.f32 0.5, %v814
        %v816 = vsub.f32 1.5, %v815
        %v817 = vmul.f32 %v812, %v816
        %v818 = vmul.f32 %v626, %v817
        %vm819 = vcmp.eq.f32.partialorder %v626, inf
        %v820 = vsel %vm819, %v626, %v818
        %vm821 = vcmp.eq.f32.partialorder %v626, 0.0
        %v822 = vand.u32 %v626, 2147483648
        %v823 = vsel %vm821, %v822, %v820
        %v824 = vrsqrt.pop %v627
        %v825 = vmul.f32 %v824, %v627
        %v826 = vmul.f32 %v825, %v824
        %v827 = vmul.f32 0.5, %v826
        %v828 = vsub.f32 1.5, %v827
        %v829 = vmul.f32 %v824, %v828
        %v830 = vmul.f32 %v627, %v829
        %vm831 = vcmp.eq.f32.partialorder %v627, inf
        %v832 = vsel %vm831, %v627, %v830
        %vm833 = vcmp.eq.f32.partialorder %v627, 0.0
        %v834 = vand.u32 %v627, 2147483648
        %v835 = vsel %vm833, %v834, %v832
        %v836 = vrsqrt.pop %v628
        %v837 = vmul.f32 %v836, %v628
        %v838 = vmul.f32 %v837, %v836
        %v839 = vmul.f32 0.5, %v838
        %v840 = vsub.f32 1.5, %v839
        %v841 = vmul.f32 %v836, %v840
        %v842 = vmul.f32 %v628, %v841
        %vm843 = vcmp.eq.f32.partialorder %v628, inf
        %v844 = vsel %vm843, %v628, %v842
        %vm845 = vcmp.eq.f32.partialorder %v628, 0.0
        %v846 = vand.u32 %v628, 2147483648
        %v847 = vsel %vm845, %v846, %v844
        %v848 = vrsqrt.pop %v629
        %v849 = vmul.f32 %v848, %v629
        %v850 = vmul.f32 %v849, %v848
        %v851 = vmul.f32 0.5, %v850
        %v852 = vsub.f32 1.5, %v851
        %v853 = vmul.f32 %v848, %v852
        %v854 = vmul.f32 %v629, %v853
        %vm855 = vcmp.eq.f32.partialorder %v629, inf
        %v856 = vsel %vm855, %v629, %v854
        %vm857 = vcmp.eq.f32.partialorder %v629, 0.0
        %v858 = vand.u32 %v629, 2147483648
        %v859 = vsel %vm857, %v858, %v856
        %v860 = vrsqrt.pop %v630
        %v861 = vmul.f32 %v860, %v630
        %v862 = vmul.f32 %v861, %v860
        %v863 = vmul.f32 0.5, %v862
        %v864 = vsub.f32 1.5, %v863
        %v865 = vmul.f32 %v860, %v864
        %v866 = vmul.f32 %v630, %v865
        %vm867 = vcmp.eq.f32.partialorder %v630, inf
        %v868 = vsel %vm867, %v630, %v866
        %vm869 = vcmp.eq.f32.partialorder %v630, 0.0
        %v870 = vand.u32 %v630, 2147483648
        %v871 = vsel %vm869, %v870, %v868
        %v872 = vrsqrt.pop %v631
        %v873 = vmul.f32 %v872, %v631
        %v874 = vmul.f32 %v873, %v872
        %v875 = vmul.f32 0.5, %v874
        %v876 = vsub.f32 1.5, %v875
        %v877 = vmul.f32 %v872, %v876
        %v878 = vmul.f32 %v631, %v877
        %vm879 = vcmp.eq.f32.partialorder %v631, inf
        %v880 = vsel %vm879, %v631, %v878
        %vm881 = vcmp.eq.f32.partialorder %v631, 0.0
        %v882 = vand.u32 %v631, 2147483648
        %v883 = vsel %vm881, %v882, %v880
        %v884 = vrsqrt.pop %v632
        %v885 = vmul.f32 %v884, %v632
        %v886 = vmul.f32 %v885, %v884
        %v887 = vmul.f32 0.5, %v886
        %v888 = vsub.f32 1.5, %v887
        %v889 = vmul.f32 %v884, %v888
        %v890 = vmul.f32 %v632, %v889
        %vm891 = vcmp.eq.f32.partialorder %v632, inf
        %v892 = vsel %vm891, %v632, %v890
        %vm893 = vcmp.eq.f32.partialorder %v632, 0.0
        %v894 = vand.u32 %v632, 2147483648
        %v895 = vsel %vm893, %v894, %v892
        %v896 = vrsqrt.pop %v633
        %v897 = vmul.f32 %v896, %v633
        %v898 = vmul.f32 %v897, %v896
        %v899 = vmul.f32 0.5, %v898
        %v900 = vsub.f32 1.5, %v899
        %v901 = vmul.f32 %v896, %v900
        %v902 = vmul.f32 %v633, %v901
        %vm903 = vcmp.eq.f32.partialorder %v633, inf
        %v904 = vsel %vm903, %v633, %v902
        %vm905 = vcmp.eq.f32.partialorder %v633, 0.0
        %v906 = vand.u32 %v633, 2147483648
        %v907 = vsel %vm905, %v906, %v904
        %v908 = vrsqrt.pop %v634
        %v909 = vmul.f32 %v908, %v634
        %v910 = vmul.f32 %v909, %v908
        %v911 = vmul.f32 0.5, %v910
        %v912 = vsub.f32 1.5, %v911
        %v913 = vmul.f32 %v908, %v912
        %v914 = vmul.f32 %v634, %v913
        %vm915 = vcmp.eq.f32.partialorder %v634, inf
        %v916 = vsel %vm915, %v634, %v914
        %vm917 = vcmp.eq.f32.partialorder %v634, 0.0
        %v918 = vand.u32 %v634, 2147483648
        %v919 = vsel %vm917, %v918, %v916
        %v920 = vrsqrt.pop %v635
        %v921 = vmul.f32 %v920, %v635
        %v922 = vmul.f32 %v921, %v920
        %v923 = vmul.f32 0.5, %v922
        %v924 = vsub.f32 1.5, %v923
        %v925 = vmul.f32 %v920, %v924
        %v926 = vmul.f32 %v635, %v925
        %vm927 = vcmp.eq.f32.partialorder %v635, inf
        %v928 = vsel %vm927, %v635, %v926
        %vm929 = vcmp.eq.f32.partialorder %v635, 0.0
        %v930 = vand.u32 %v635, 2147483648
        %v931 = vsel %vm929, %v930, %v928
        %v932 = vrsqrt.pop %v636
        %v933 = vmul.f32 %v932, %v636
        %v934 = vmul.f32 %v933, %v932
        %v935 = vmul.f32 0.5, %v934
        %v936 = vsub.f32 1.5, %v935
        %v937 = vmul.f32 %v932, %v936
        %v938 = vmul.f32 %v636, %v937
        %vm939 = vcmp.eq.f32.partialorder %v636, inf
        %v940 = vsel %vm939, %v636, %v938
        %vm941 = vcmp.eq.f32.partialorder %v636, 0.0
        %v942 = vand.u32 %v636, 2147483648
        %v943 = vsel %vm941, %v942, %v940
        %v944 = vrsqrt.pop %v637
        %v945 = vmul.f32 %v944, %v637
        %v946 = vmul.f32 %v945, %v944
        %v947 = vmul.f32 0.5, %v946
        %v948 = vsub.f32 1.5, %v947
        %v949 = vmul.f32 %v944, %v948
        %v950 = vmul.f32 %v637, %v949
        %vm951 = vcmp.eq.f32.partialorder %v637, inf
        %v952 = vsel %vm951, %v637, %v950
        %vm953 = vcmp.eq.f32.partialorder %v637, 0.0
        %v954 = vand.u32 %v637, 2147483648
        %v955 = vsel %vm953, %v954, %v952
        %v956 = vrsqrt.pop %v638
        %v957 = vmul.f32 %v956, %v638
        %v958 = vmul.f32 %v957, %v956
        %v959 = vmul.f32 0.5, %v958
        %v960 = vsub.f32 1.5, %v959
        %v961 = vmul.f32 %v956, %v960
        %v962 = vmul.f32 %v638, %v961
        %vm963 = vcmp.eq.f32.partialorder %v638, inf
        %v964 = vsel %vm963, %v638, %v962
        %vm965 = vcmp.eq.f32.partialorder %v638, 0.0
        %v966 = vand.u32 %v638, 2147483648
        %v967 = vsel %vm965, %v966, %v964
        %v968 = vrsqrt.pop %v639
        %v969 = vmul.f32 %v968, %v639
        %v970 = vmul.f32 %v969, %v968
        %v971 = vmul.f32 0.5, %v970
        %v972 = vsub.f32 1.5, %v971
        %v973 = vmul.f32 %v968, %v972
        %v974 = vmul.f32 %v639, %v973
        %vm975 = vcmp.eq.f32.partialorder %v639, inf
        %v976 = vsel %vm975, %v639, %v974
        %vm977 = vcmp.eq.f32.partialorder %v639, 0.0
        %v978 = vand.u32 %v639, 2147483648
        %v979 = vsel %vm977, %v978, %v976
        %v980 = vrsqrt.pop %v640
        %v981 = vmul.f32 %v980, %v640
        %v982 = vmul.f32 %v981, %v980
        %v983 = vmul.f32 0.5, %v982
        %v984 = vsub.f32 1.5, %v983
        %v985 = vmul.f32 %v980, %v984
        %v986 = vmul.f32 %v640, %v985
        %vm987 = vcmp.eq.f32.partialorder %v640, inf
        %v988 = vsel %vm987, %v640, %v986
        %vm989 = vcmp.eq.f32.partialorder %v640, 0.0
        %v990 = vand.u32 %v640, 2147483648
        %v991 = vsel %vm989, %v990, %v988
        %v992 = vrsqrt.pop %v641
        %v993 = vmul.f32 %v992, %v641
        %v994 = vmul.f32 %v993, %v992
        %v995 = vmul.f32 0.5, %v994
        %v996 = vsub.f32 1.5, %v995
        %v997 = vmul.f32 %v992, %v996
        %v998 = vmul.f32 %v641, %v997
        %vm999 = vcmp.eq.f32.partialorder %v641, inf
        %v1000 = vsel %vm999, %v641, %v998
        %vm1001 = vcmp.eq.f32.partialorder %v641, 0.0
        %v1002 = vand.u32 %v641, 2147483648
        %v1003 = vsel %vm1001, %v1002, %v1000
        %v1004 = vrsqrt.pop %v642
        %v1005 = vmul.f32 %v1004, %v642
        %v1006 = vmul.f32 %v1005, %v1004
        %v1007 = vmul.f32 0.5, %v1006
        %v1008 = vsub.f32 1.5, %v1007
        %v1009 = vmul.f32 %v1004, %v1008
        %v1010 = vmul.f32 %v642, %v1009
        %vm1011 = vcmp.eq.f32.partialorder %v642, inf
        %v1012 = vsel %vm1011, %v642, %v1010
        %vm1013 = vcmp.eq.f32.partialorder %v642, 0.0
        %v1014 = vand.u32 %v642, 2147483648
        %v1015 = vsel %vm1013, %v1014, %v1012
        %v1016 = vrsqrt.pop %v643
        %v1017 = vmul.f32 %v1016, %v643
        %v1018 = vmul.f32 %v1017, %v1016
        %v1019 = vmul.f32 0.5, %v1018
        %v1020 = vsub.f32 1.5, %v1019
        %v1021 = vmul.f32 %v1016, %v1020
        %v1022 = vmul.f32 %v643, %v1021
        %vm1023 = vcmp.eq.f32.partialorder %v643, inf
        %v1024 = vsel %vm1023, %v643, %v1022
        %vm1025 = vcmp.eq.f32.partialorder %v643, 0.0
        %v1026 = vand.u32 %v643, 2147483648
        %v1027 = vsel %vm1025, %v1026, %v1024
        %v1028 = vld [vmem:[%s1] sm:$0x1]
        %v1030 = vperm.slane %v1028, 0
        %v1032 = vmul.f32 %v1030, %v484
        %v1033 = vmul.f32 %v1030, %v485
        %v1034 = vmul.f32 %v1030, %v486
        %v1035 = vmul.f32 %v1030, %v487
        %v1036 = vmul.f32 %v1030, %v488
        %v1037 = vmul.f32 %v1030, %v489
        %v1038 = vmul.f32 %v1030, %v490
        %v1039 = vmul.f32 %v1030, %v491
        %v1040 = vmul.f32 %v1030, %v492
        %v1041 = vmul.f32 %v1030, %v493
        %v1042 = vmul.f32 %v1030, %v494
        %v1043 = vmul.f32 %v1030, %v495
        %v1044 = vmul.f32 %v1030, %v496
        %v1045 = vmul.f32 %v1030, %v497
        %v1046 = vmul.f32 %v1030, %v498
        %v1047 = vmul.f32 %v1030, %v499
        %v1048 = vmul.f32 %v1030, %v500
        %v1049 = vmul.f32 %v1030, %v501
        %v1050 = vmul.f32 %v1030, %v502
        %v1051 = vmul.f32 %v1030, %v503
        %v1052 = vmul.f32 %v1030, %v504
        %v1053 = vmul.f32 %v1030, %v505
        %v1054 = vmul.f32 %v1030, %v506
        %v1055 = vmul.f32 %v1030, %v507
        %v1056 = vmul.f32 %v1030, %v508
        %v1057 = vmul.f32 %v1030, %v509
        %v1058 = vmul.f32 %v1030, %v510
        %v1059 = vmul.f32 %v1030, %v511
        %v1060 = vmul.f32 %v1030, %v512
        %v1061 = vmul.f32 %v1030, %v513
        %v1062 = vmul.f32 %v1030, %v514
        %v1063 = vmul.f32 %v1030, %v515
        %v1064 = vadd.f32 %v655, 1e-06
        %v1065 = vadd.f32 %v667, 1e-06
        %v1066 = vadd.f32 %v679, 1e-06
        %v1067 = vadd.f32 %v691, 1e-06
        %v1068 = vadd.f32 %v703, 1e-06
        %v1069 = vadd.f32 %v715, 1e-06
        %v1070 = vadd.f32 %v727, 1e-06
        %v1071 = vadd.f32 %v739, 1e-06
        %v1072 = vadd.f32 %v751, 1e-06
        %v1073 = vadd.f32 %v763, 1e-06
        %v1074 = vadd.f32 %v775, 1e-06
        %v1075 = vadd.f32 %v787, 1e-06
        %v1076 = vadd.f32 %v799, 1e-06
        %v1077 = vadd.f32 %v811, 1e-06
        %v1078 = vadd.f32 %v823, 1e-06
        %v1079 = vadd.f32 %v835, 1e-06
        %v1080 = vadd.f32 %v847, 1e-06
        %v1081 = vadd.f32 %v859, 1e-06
        %v1082 = vadd.f32 %v871, 1e-06
        %v1083 = vadd.f32 %v883, 1e-06
        %v1084 = vadd.f32 %v895, 1e-06
        %v1085 = vadd.f32 %v907, 1e-06
        %v1086 = vadd.f32 %v919, 1e-06
        %v1087 = vadd.f32 %v931, 1e-06
        %v1088 = vadd.f32 %v943, 1e-06
        %v1089 = vadd.f32 %v955, 1e-06
        %v1090 = vadd.f32 %v967, 1e-06
        %v1091 = vadd.f32 %v979, 1e-06
        %v1092 = vadd.f32 %v991, 1e-06
        %v1093 = vadd.f32 %v1003, 1e-06
        %v1094 = vadd.f32 %v1015, 1e-06
        %v1095 = vadd.f32 %v1027, 1e-06
        %v1096 = vrcp.pop %v1064
        %v1097 = vmul.f32 %v1064, %v1096
        %v1098 = vsub.f32 1.0, %v1097
        %v1099 = vmul.f32 %v1096, %v1098
        %v1100 = vadd.f32 %v1096, %v1099
        %vm1101 = vweird.f32 %v1064
        %vm1102 = vweird.f32 %v1096
        %vm1103 = vmor %vm1101, %vm1102
        %v1104 = vsel %vm1103, %v1096, %v1100
        %v1105 = vand.u32 2147483647, %v1064
        %vm1106 = vcmp.eq.f32.partialorder %v1105, 8.507059e+37
        %v1107 = vand.u32 %v1064, 2147483648
        %v1108 = vor.u32 1.1754944e-38, %v1107
        %v1109 = vsel %vm1106, %v1108, %v1104
        %v1110 = vmul.f32 %v1032, %v1109
        %v1111 = vrcp.pop %v1065
        %v1112 = vmul.f32 %v1065, %v1111
        %v1113 = vsub.f32 1.0, %v1112
        %v1114 = vmul.f32 %v1111, %v1113
        %v1115 = vadd.f32 %v1111, %v1114
        %vm1116 = vweird.f32 %v1065
        %vm1117 = vweird.f32 %v1111
        %vm1118 = vmor %vm1116, %vm1117
        %v1119 = vsel %vm1118, %v1111, %v1115
        %v1120 = vand.u32 2147483647, %v1065
        %vm1121 = vcmp.eq.f32.partialorder %v1120, 8.507059e+37
        %v1122 = vand.u32 %v1065, 2147483648
        %v1123 = vor.u32 1.1754944e-38, %v1122
        %v1124 = vsel %vm1121, %v1123, %v1119
        %v1125 = vmul.f32 %v1033, %v1124
        %v1126 = vrcp.pop %v1066
        %v1127 = vmul.f32 %v1066, %v1126
        %v1128 = vsub.f32 1.0, %v1127
        %v1129 = vmul.f32 %v1126, %v1128
        %v1130 = vadd.f32 %v1126, %v1129
        %vm1131 = vweird.f32 %v1066
        %vm1132 = vweird.f32 %v1126
        %vm1133 = vmor %vm1131, %vm1132
        %v1134 = vsel %vm1133, %v1126, %v1130
        %v1135 = vand.u32 2147483647, %v1066
        %vm1136 = vcmp.eq.f32.partialorder %v1135, 8.507059e+37
        %v1137 = vand.u32 %v1066, 2147483648
        %v1138 = vor.u32 1.1754944e-38, %v1137
        %v1139 = vsel %vm1136, %v1138, %v1134
        %v1140 = vmul.f32 %v1034, %v1139
        %v1141 = vrcp.pop %v1067
        %v1142 = vmul.f32 %v1067, %v1141
        %v1143 = vsub.f32 1.0, %v1142
        %v1144 = vmul.f32 %v1141, %v1143
        %v1145 = vadd.f32 %v1141, %v1144
        %vm1146 = vweird.f32 %v1067
        %vm1147 = vweird.f32 %v1141
        %vm1148 = vmor %vm1146, %vm1147
        %v1149 = vsel %vm1148, %v1141, %v1145
        %v1150 = vand.u32 2147483647, %v1067
        %vm1151 = vcmp.eq.f32.partialorder %v1150, 8.507059e+37
        %v1152 = vand.u32 %v1067, 2147483648
        %v1153 = vor.u32 1.1754944e-38, %v1152
        %v1154 = vsel %vm1151, %v1153, %v1149
        %v1155 = vmul.f32 %v1035, %v1154
        %v1156 = vrcp.pop %v1068
        %v1157 = vmul.f32 %v1068, %v1156
        %v1158 = vsub.f32 1.0, %v1157
        %v1159 = vmul.f32 %v1156, %v1158
        %v1160 = vadd.f32 %v1156, %v1159
        %vm1161 = vweird.f32 %v1068
        %vm1162 = vweird.f32 %v1156
        %vm1163 = vmor %vm1161, %vm1162
        %v1164 = vsel %vm1163, %v1156, %v1160
        %v1165 = vand.u32 2147483647, %v1068
        %vm1166 = vcmp.eq.f32.partialorder %v1165, 8.507059e+37
        %v1167 = vand.u32 %v1068, 2147483648
        %v1168 = vor.u32 1.1754944e-38, %v1167
        %v1169 = vsel %vm1166, %v1168, %v1164
        %v1170 = vmul.f32 %v1036, %v1169
        %v1171 = vrcp.pop %v1069
        %v1172 = vmul.f32 %v1069, %v1171
        %v1173 = vsub.f32 1.0, %v1172
        %v1174 = vmul.f32 %v1171, %v1173
        %v1175 = vadd.f32 %v1171, %v1174
        %vm1176 = vweird.f32 %v1069
        %vm1177 = vweird.f32 %v1171
        %vm1178 = vmor %vm1176, %vm1177
        %v1179 = vsel %vm1178, %v1171, %v1175
        %v1180 = vand.u32 2147483647, %v1069
        %vm1181 = vcmp.eq.f32.partialorder %v1180, 8.507059e+37
        %v1182 = vand.u32 %v1069, 2147483648
        %v1183 = vor.u32 1.1754944e-38, %v1182
        %v1184 = vsel %vm1181, %v1183, %v1179
        %v1185 = vmul.f32 %v1037, %v1184
        %v1186 = vrcp.pop %v1070
        %v1187 = vmul.f32 %v1070, %v1186
        %v1188 = vsub.f32 1.0, %v1187
        %v1189 = vmul.f32 %v1186, %v1188
        %v1190 = vadd.f32 %v1186, %v1189
        %vm1191 = vweird.f32 %v1070
        %vm1192 = vweird.f32 %v1186
        %vm1193 = vmor %vm1191, %vm1192
        %v1194 = vsel %vm1193, %v1186, %v1190
        %v1195 = vand.u32 2147483647, %v1070
        %vm1196 = vcmp.eq.f32.partialorder %v1195, 8.507059e+37
        %v1197 = vand.u32 %v1070, 2147483648
        %v1198 = vor.u32 1.1754944e-38, %v1197
        %v1199 = vsel %vm1196, %v1198, %v1194
        %v1200 = vmul.f32 %v1038, %v1199
        %v1201 = vrcp.pop %v1071
        %v1202 = vmul.f32 %v1071, %v1201
        %v1203 = vsub.f32 1.0, %v1202
        %v1204 = vmul.f32 %v1201, %v1203
        %v1205 = vadd.f32 %v1201, %v1204
        %vm1206 = vweird.f32 %v1071
        %vm1207 = vweird.f32 %v1201
        %vm1208 = vmor %vm1206, %vm1207
        %v1209 = vsel %vm1208, %v1201, %v1205
        %v1210 = vand.u32 2147483647, %v1071
        %vm1211 = vcmp.eq.f32.partialorder %v1210, 8.507059e+37
        %v1212 = vand.u32 %v1071, 2147483648
        %v1213 = vor.u32 1.1754944e-38, %v1212
        %v1214 = vsel %vm1211, %v1213, %v1209
        %v1215 = vmul.f32 %v1039, %v1214
        %v1216 = vrcp.pop %v1072
        %v1217 = vmul.f32 %v1072, %v1216
        %v1218 = vsub.f32 1.0, %v1217
        %v1219 = vmul.f32 %v1216, %v1218
        %v1220 = vadd.f32 %v1216, %v1219
        %vm1221 = vweird.f32 %v1072
        %vm1222 = vweird.f32 %v1216
        %vm1223 = vmor %vm1221, %vm1222
        %v1224 = vsel %vm1223, %v1216, %v1220
        %v1225 = vand.u32 2147483647, %v1072
        %vm1226 = vcmp.eq.f32.partialorder %v1225, 8.507059e+37
        %v1227 = vand.u32 %v1072, 2147483648
        %v1228 = vor.u32 1.1754944e-38, %v1227
        %v1229 = vsel %vm1226, %v1228, %v1224
        %v1230 = vmul.f32 %v1040, %v1229
        %v1231 = vrcp.pop %v1073
        %v1232 = vmul.f32 %v1073, %v1231
        %v1233 = vsub.f32 1.0, %v1232
        %v1234 = vmul.f32 %v1231, %v1233
        %v1235 = vadd.f32 %v1231, %v1234
        %vm1236 = vweird.f32 %v1073
        %vm1237 = vweird.f32 %v1231
        %vm1238 = vmor %vm1236, %vm1237
        %v1239 = vsel %vm1238, %v1231, %v1235
        %v1240 = vand.u32 2147483647, %v1073
        %vm1241 = vcmp.eq.f32.partialorder %v1240, 8.507059e+37
        %v1242 = vand.u32 %v1073, 2147483648
        %v1243 = vor.u32 1.1754944e-38, %v1242
        %v1244 = vsel %vm1241, %v1243, %v1239
        %v1245 = vmul.f32 %v1041, %v1244
        %v1246 = vrcp.pop %v1074
        %v1247 = vmul.f32 %v1074, %v1246
        %v1248 = vsub.f32 1.0, %v1247
        %v1249 = vmul.f32 %v1246, %v1248
        %v1250 = vadd.f32 %v1246, %v1249
        %vm1251 = vweird.f32 %v1074
        %vm1252 = vweird.f32 %v1246
        %vm1253 = vmor %vm1251, %vm1252
        %v1254 = vsel %vm1253, %v1246, %v1250
        %v1255 = vand.u32 2147483647, %v1074
        %vm1256 = vcmp.eq.f32.partialorder %v1255, 8.507059e+37
        %v1257 = vand.u32 %v1074, 2147483648
        %v1258 = vor.u32 1.1754944e-38, %v1257
        %v1259 = vsel %vm1256, %v1258, %v1254
        %v1260 = vmul.f32 %v1042, %v1259
        %v1261 = vrcp.pop %v1075
        %v1262 = vmul.f32 %v1075, %v1261
        %v1263 = vsub.f32 1.0, %v1262
        %v1264 = vmul.f32 %v1261, %v1263
        %v1265 = vadd.f32 %v1261, %v1264
        %vm1266 = vweird.f32 %v1075
        %vm1267 = vweird.f32 %v1261
        %vm1268 = vmor %vm1266, %vm1267
        %v1269 = vsel %vm1268, %v1261, %v1265
        %v1270 = vand.u32 2147483647, %v1075
        %vm1271 = vcmp.eq.f32.partialorder %v1270, 8.507059e+37
        %v1272 = vand.u32 %v1075, 2147483648
        %v1273 = vor.u32 1.1754944e-38, %v1272
        %v1274 = vsel %vm1271, %v1273, %v1269
        %v1275 = vmul.f32 %v1043, %v1274
        %v1276 = vrcp.pop %v1076
        %v1277 = vmul.f32 %v1076, %v1276
        %v1278 = vsub.f32 1.0, %v1277
        %v1279 = vmul.f32 %v1276, %v1278
        %v1280 = vadd.f32 %v1276, %v1279
        %vm1281 = vweird.f32 %v1076
        %vm1282 = vweird.f32 %v1276
        %vm1283 = vmor %vm1281, %vm1282
        %v1284 = vsel %vm1283, %v1276, %v1280
        %v1285 = vand.u32 2147483647, %v1076
        %vm1286 = vcmp.eq.f32.partialorder %v1285, 8.507059e+37
        %v1287 = vand.u32 %v1076, 2147483648
        %v1288 = vor.u32 1.1754944e-38, %v1287
        %v1289 = vsel %vm1286, %v1288, %v1284
        %v1290 = vmul.f32 %v1044, %v1289
        %v1291 = vrcp.pop %v1077
        %v1292 = vmul.f32 %v1077, %v1291
        %v1293 = vsub.f32 1.0, %v1292
        %v1294 = vmul.f32 %v1291, %v1293
        %v1295 = vadd.f32 %v1291, %v1294
        %vm1296 = vweird.f32 %v1077
        %vm1297 = vweird.f32 %v1291
        %vm1298 = vmor %vm1296, %vm1297
        %v1299 = vsel %vm1298, %v1291, %v1295
        %v1300 = vand.u32 2147483647, %v1077
        %vm1301 = vcmp.eq.f32.partialorder %v1300, 8.507059e+37
        %v1302 = vand.u32 %v1077, 2147483648
        %v1303 = vor.u32 1.1754944e-38, %v1302
        %v1304 = vsel %vm1301, %v1303, %v1299
        %v1305 = vmul.f32 %v1045, %v1304
        %v1306 = vrcp.pop %v1078
        %v1307 = vmul.f32 %v1078, %v1306
        %v1308 = vsub.f32 1.0, %v1307
        %v1309 = vmul.f32 %v1306, %v1308
        %v1310 = vadd.f32 %v1306, %v1309
        %vm1311 = vweird.f32 %v1078
        %vm1312 = vweird.f32 %v1306
        %vm1313 = vmor %vm1311, %vm1312
        %v1314 = vsel %vm1313, %v1306, %v1310
        %v1315 = vand.u32 2147483647, %v1078
        %vm1316 = vcmp.eq.f32.partialorder %v1315, 8.507059e+37
        %v1317 = vand.u32 %v1078, 2147483648
        %v1318 = vor.u32 1.1754944e-38, %v1317
        %v1319 = vsel %vm1316, %v1318, %v1314
        %v1320 = vmul.f32 %v1046, %v1319
        %v1321 = vrcp.pop %v1079
        %v1322 = vmul.f32 %v1079, %v1321
        %v1323 = vsub.f32 1.0, %v1322
        %v1324 = vmul.f32 %v1321, %v1323
        %v1325 = vadd.f32 %v1321, %v1324
        %vm1326 = vweird.f32 %v1079
        %vm1327 = vweird.f32 %v1321
        %vm1328 = vmor %vm1326, %vm1327
        %v1329 = vsel %vm1328, %v1321, %v1325
        %v1330 = vand.u32 2147483647, %v1079
        %vm1331 = vcmp.eq.f32.partialorder %v1330, 8.507059e+37
        %v1332 = vand.u32 %v1079, 2147483648
        %v1333 = vor.u32 1.1754944e-38, %v1332
        %v1334 = vsel %vm1331, %v1333, %v1329
        %v1335 = vmul.f32 %v1047, %v1334
        %v1336 = vrcp.pop %v1080
        %v1337 = vmul.f32 %v1080, %v1336
        %v1338 = vsub.f32 1.0, %v1337
        %v1339 = vmul.f32 %v1336, %v1338
        %v1340 = vadd.f32 %v1336, %v1339
        %vm1341 = vweird.f32 %v1080
        %vm1342 = vweird.f32 %v1336
        %vm1343 = vmor %vm1341, %vm1342
        %v1344 = vsel %vm1343, %v1336, %v1340
        %v1345 = vand.u32 2147483647, %v1080
        %vm1346 = vcmp.eq.f32.partialorder %v1345, 8.507059e+37
        %v1347 = vand.u32 %v1080, 2147483648
        %v1348 = vor.u32 1.1754944e-38, %v1347
        %v1349 = vsel %vm1346, %v1348, %v1344
        %v1350 = vmul.f32 %v1048, %v1349
        %v1351 = vrcp.pop %v1081
        %v1352 = vmul.f32 %v1081, %v1351
        %v1353 = vsub.f32 1.0, %v1352
        %v1354 = vmul.f32 %v1351, %v1353
        %v1355 = vadd.f32 %v1351, %v1354
        %vm1356 = vweird.f32 %v1081
        %vm1357 = vweird.f32 %v1351
        %vm1358 = vmor %vm1356, %vm1357
        %v1359 = vsel %vm1358, %v1351, %v1355
        %v1360 = vand.u32 2147483647, %v1081
        %vm1361 = vcmp.eq.f32.partialorder %v1360, 8.507059e+37
        %v1362 = vand.u32 %v1081, 2147483648
        %v1363 = vor.u32 1.1754944e-38, %v1362
        %v1364 = vsel %vm1361, %v1363, %v1359
        %v1365 = vmul.f32 %v1049, %v1364
        %v1366 = vrcp.pop %v1082
        %v1367 = vmul.f32 %v1082, %v1366
        %v1368 = vsub.f32 1.0, %v1367
        %v1369 = vmul.f32 %v1366, %v1368
        %v1370 = vadd.f32 %v1366, %v1369
        %vm1371 = vweird.f32 %v1082
        %vm1372 = vweird.f32 %v1366
        %vm1373 = vmor %vm1371, %vm1372
        %v1374 = vsel %vm1373, %v1366, %v1370
        %v1375 = vand.u32 2147483647, %v1082
        %vm1376 = vcmp.eq.f32.partialorder %v1375, 8.507059e+37
        %v1377 = vand.u32 %v1082, 2147483648
        %v1378 = vor.u32 1.1754944e-38, %v1377
        %v1379 = vsel %vm1376, %v1378, %v1374
        %v1380 = vmul.f32 %v1050, %v1379
        %v1381 = vrcp.pop %v1083
        %v1382 = vmul.f32 %v1083, %v1381
        %v1383 = vsub.f32 1.0, %v1382
        %v1384 = vmul.f32 %v1381, %v1383
        %v1385 = vadd.f32 %v1381, %v1384
        %vm1386 = vweird.f32 %v1083
        %vm1387 = vweird.f32 %v1381
        %vm1388 = vmor %vm1386, %vm1387
        %v1389 = vsel %vm1388, %v1381, %v1385
        %v1390 = vand.u32 2147483647, %v1083
        %vm1391 = vcmp.eq.f32.partialorder %v1390, 8.507059e+37
        %v1392 = vand.u32 %v1083, 2147483648
        %v1393 = vor.u32 1.1754944e-38, %v1392
        %v1394 = vsel %vm1391, %v1393, %v1389
        %v1395 = vmul.f32 %v1051, %v1394
        %v1396 = vrcp.pop %v1084
        %v1397 = vmul.f32 %v1084, %v1396
        %v1398 = vsub.f32 1.0, %v1397
        %v1399 = vmul.f32 %v1396, %v1398
        %v1400 = vadd.f32 %v1396, %v1399
        %vm1401 = vweird.f32 %v1084
        %vm1402 = vweird.f32 %v1396
        %vm1403 = vmor %vm1401, %vm1402
        %v1404 = vsel %vm1403, %v1396, %v1400
        %v1405 = vand.u32 2147483647, %v1084
        %vm1406 = vcmp.eq.f32.partialorder %v1405, 8.507059e+37
        %v1407 = vand.u32 %v1084, 2147483648
        %v1408 = vor.u32 1.1754944e-38, %v1407
        %v1409 = vsel %vm1406, %v1408, %v1404
        %v1410 = vmul.f32 %v1052, %v1409
        %v1411 = vrcp.pop %v1085
        %v1412 = vmul.f32 %v1085, %v1411
        %v1413 = vsub.f32 1.0, %v1412
        %v1414 = vmul.f32 %v1411, %v1413
        %v1415 = vadd.f32 %v1411, %v1414
        %vm1416 = vweird.f32 %v1085
        %vm1417 = vweird.f32 %v1411
        %vm1418 = vmor %vm1416, %vm1417
        %v1419 = vsel %vm1418, %v1411, %v1415
        %v1420 = vand.u32 2147483647, %v1085
        %vm1421 = vcmp.eq.f32.partialorder %v1420, 8.507059e+37
        %v1422 = vand.u32 %v1085, 2147483648
        %v1423 = vor.u32 1.1754944e-38, %v1422
        %v1424 = vsel %vm1421, %v1423, %v1419
        %v1425 = vmul.f32 %v1053, %v1424
        %v1426 = vrcp.pop %v1086
        %v1427 = vmul.f32 %v1086, %v1426
        %v1428 = vsub.f32 1.0, %v1427
        %v1429 = vmul.f32 %v1426, %v1428
        %v1430 = vadd.f32 %v1426, %v1429
        %vm1431 = vweird.f32 %v1086
        %vm1432 = vweird.f32 %v1426
        %vm1433 = vmor %vm1431, %vm1432
        %v1434 = vsel %vm1433, %v1426, %v1430
        %v1435 = vand.u32 2147483647, %v1086
        %vm1436 = vcmp.eq.f32.partialorder %v1435, 8.507059e+37
        %v1437 = vand.u32 %v1086, 2147483648
        %v1438 = vor.u32 1.1754944e-38, %v1437
        %v1439 = vsel %vm1436, %v1438, %v1434
        %v1440 = vmul.f32 %v1054, %v1439
        %v1441 = vrcp.pop %v1087
        %v1442 = vmul.f32 %v1087, %v1441
        %v1443 = vsub.f32 1.0, %v1442
        %v1444 = vmul.f32 %v1441, %v1443
        %v1445 = vadd.f32 %v1441, %v1444
        %vm1446 = vweird.f32 %v1087
        %vm1447 = vweird.f32 %v1441
        %vm1448 = vmor %vm1446, %vm1447
        %v1449 = vsel %vm1448, %v1441, %v1445
        %v1450 = vand.u32 2147483647, %v1087
        %vm1451 = vcmp.eq.f32.partialorder %v1450, 8.507059e+37
        %v1452 = vand.u32 %v1087, 2147483648
        %v1453 = vor.u32 1.1754944e-38, %v1452
        %v1454 = vsel %vm1451, %v1453, %v1449
        %v1455 = vmul.f32 %v1055, %v1454
        %v1456 = vrcp.pop %v1088
        %v1457 = vmul.f32 %v1088, %v1456
        %v1458 = vsub.f32 1.0, %v1457
        %v1459 = vmul.f32 %v1456, %v1458
        %v1460 = vadd.f32 %v1456, %v1459
        %vm1461 = vweird.f32 %v1088
        %vm1462 = vweird.f32 %v1456
        %vm1463 = vmor %vm1461, %vm1462
        %v1464 = vsel %vm1463, %v1456, %v1460
        %v1465 = vand.u32 2147483647, %v1088
        %vm1466 = vcmp.eq.f32.partialorder %v1465, 8.507059e+37
        %v1467 = vand.u32 %v1088, 2147483648
        %v1468 = vor.u32 1.1754944e-38, %v1467
        %v1469 = vsel %vm1466, %v1468, %v1464
        %v1470 = vmul.f32 %v1056, %v1469
        %v1471 = vrcp.pop %v1089
        %v1472 = vmul.f32 %v1089, %v1471
        %v1473 = vsub.f32 1.0, %v1472
        %v1474 = vmul.f32 %v1471, %v1473
        %v1475 = vadd.f32 %v1471, %v1474
        %vm1476 = vweird.f32 %v1089
        %vm1477 = vweird.f32 %v1471
        %vm1478 = vmor %vm1476, %vm1477
        %v1479 = vsel %vm1478, %v1471, %v1475
        %v1480 = vand.u32 2147483647, %v1089
        %vm1481 = vcmp.eq.f32.partialorder %v1480, 8.507059e+37
        %v1482 = vand.u32 %v1089, 2147483648
        %v1483 = vor.u32 1.1754944e-38, %v1482
        %v1484 = vsel %vm1481, %v1483, %v1479
        %v1485 = vmul.f32 %v1057, %v1484
        %v1486 = vrcp.pop %v1090
        %v1487 = vmul.f32 %v1090, %v1486
        %v1488 = vsub.f32 1.0, %v1487
        %v1489 = vmul.f32 %v1486, %v1488
        %v1490 = vadd.f32 %v1486, %v1489
        %vm1491 = vweird.f32 %v1090
        %vm1492 = vweird.f32 %v1486
        %vm1493 = vmor %vm1491, %vm1492
        %v1494 = vsel %vm1493, %v1486, %v1490
        %v1495 = vand.u32 2147483647, %v1090
        %vm1496 = vcmp.eq.f32.partialorder %v1495, 8.507059e+37
        %v1497 = vand.u32 %v1090, 2147483648
        %v1498 = vor.u32 1.1754944e-38, %v1497
        %v1499 = vsel %vm1496, %v1498, %v1494
        %v1500 = vmul.f32 %v1058, %v1499
        %v1501 = vrcp.pop %v1091
        %v1502 = vmul.f32 %v1091, %v1501
        %v1503 = vsub.f32 1.0, %v1502
        %v1504 = vmul.f32 %v1501, %v1503
        %v1505 = vadd.f32 %v1501, %v1504
        %vm1506 = vweird.f32 %v1091
        %vm1507 = vweird.f32 %v1501
        %vm1508 = vmor %vm1506, %vm1507
        %v1509 = vsel %vm1508, %v1501, %v1505
        %v1510 = vand.u32 2147483647, %v1091
        %vm1511 = vcmp.eq.f32.partialorder %v1510, 8.507059e+37
        %v1512 = vand.u32 %v1091, 2147483648
        %v1513 = vor.u32 1.1754944e-38, %v1512
        %v1514 = vsel %vm1511, %v1513, %v1509
        %v1515 = vmul.f32 %v1059, %v1514
        %v1516 = vrcp.pop %v1092
        %v1517 = vmul.f32 %v1092, %v1516
        %v1518 = vsub.f32 1.0, %v1517
        %v1519 = vmul.f32 %v1516, %v1518
        %v1520 = vadd.f32 %v1516, %v1519
        %vm1521 = vweird.f32 %v1092
        %vm1522 = vweird.f32 %v1516
        %vm1523 = vmor %vm1521, %vm1522
        %v1524 = vsel %vm1523, %v1516, %v1520
        %v1525 = vand.u32 2147483647, %v1092
        %vm1526 = vcmp.eq.f32.partialorder %v1525, 8.507059e+37
        %v1527 = vand.u32 %v1092, 2147483648
        %v1528 = vor.u32 1.1754944e-38, %v1527
        %v1529 = vsel %vm1526, %v1528, %v1524
        %v1530 = vmul.f32 %v1060, %v1529
        %v1531 = vrcp.pop %v1093
        %v1532 = vmul.f32 %v1093, %v1531
        %v1533 = vsub.f32 1.0, %v1532
        %v1534 = vmul.f32 %v1531, %v1533
        %v1535 = vadd.f32 %v1531, %v1534
        %vm1536 = vweird.f32 %v1093
        %vm1537 = vweird.f32 %v1531
        %vm1538 = vmor %vm1536, %vm1537
        %v1539 = vsel %vm1538, %v1531, %v1535
        %v1540 = vand.u32 2147483647, %v1093
        %vm1541 = vcmp.eq.f32.partialorder %v1540, 8.507059e+37
        %v1542 = vand.u32 %v1093, 2147483648
        %v1543 = vor.u32 1.1754944e-38, %v1542
        %v1544 = vsel %vm1541, %v1543, %v1539
        %v1545 = vmul.f32 %v1061, %v1544
        %v1546 = vrcp.pop %v1094
        %v1547 = vmul.f32 %v1094, %v1546
        %v1548 = vsub.f32 1.0, %v1547
        %v1549 = vmul.f32 %v1546, %v1548
        %v1550 = vadd.f32 %v1546, %v1549
        %vm1551 = vweird.f32 %v1094
        %vm1552 = vweird.f32 %v1546
        %vm1553 = vmor %vm1551, %vm1552
        %v1554 = vsel %vm1553, %v1546, %v1550
        %v1555 = vand.u32 2147483647, %v1094
        %vm1556 = vcmp.eq.f32.partialorder %v1555, 8.507059e+37
        %v1557 = vand.u32 %v1094, 2147483648
        %v1558 = vor.u32 1.1754944e-38, %v1557
        %v1559 = vsel %vm1556, %v1558, %v1554
        %v1560 = vmul.f32 %v1062, %v1559
        %v1561 = vrcp.pop %v1095
        %v1562 = vmul.f32 %v1095, %v1561
        %v1563 = vsub.f32 1.0, %v1562
        %v1564 = vmul.f32 %v1561, %v1563
        %v1565 = vadd.f32 %v1561, %v1564
        %vm1566 = vweird.f32 %v1095
        %vm1567 = vweird.f32 %v1561
        %vm1568 = vmor %vm1566, %vm1567
        %v1569 = vsel %vm1568, %v1561, %v1565
        %v1570 = vand.u32 2147483647, %v1095
        %vm1571 = vcmp.eq.f32.partialorder %v1570, 8.507059e+37
        %v1572 = vand.u32 %v1095, 2147483648
        %v1573 = vor.u32 1.1754944e-38, %v1572
        %v1574 = vsel %vm1571, %v1573, %v1569
        %v1575 = vmul.f32 %v1063, %v1574
        %v1576 = vld [vmem:[%s2] sm:$0x1]
        %v1578 = vperm.slane %v1576, 0
        %v1580 = vadd.f32 %v1110, %v1578
        %v1581 = vadd.f32 %v1125, %v1578
        %v1582 = vadd.f32 %v1140, %v1578
        %v1583 = vadd.f32 %v1155, %v1578
        %v1584 = vadd.f32 %v1170, %v1578
        %v1585 = vadd.f32 %v1185, %v1578
        %v1586 = vadd.f32 %v1200, %v1578
        %v1587 = vadd.f32 %v1215, %v1578
        %v1588 = vadd.f32 %v1230, %v1578
        %v1589 = vadd.f32 %v1245, %v1578
        %v1590 = vadd.f32 %v1260, %v1578
        %v1591 = vadd.f32 %v1275, %v1578
        %v1592 = vadd.f32 %v1290, %v1578
        %v1593 = vadd.f32 %v1305, %v1578
        %v1594 = vadd.f32 %v1320, %v1578
        %v1595 = vadd.f32 %v1335, %v1578
        %v1596 = vadd.f32 %v1350, %v1578
        %v1597 = vadd.f32 %v1365, %v1578
        %v1598 = vadd.f32 %v1380, %v1578
        %v1599 = vadd.f32 %v1395, %v1578
        %v1600 = vadd.f32 %v1410, %v1578
        %v1601 = vadd.f32 %v1425, %v1578
        %v1602 = vadd.f32 %v1440, %v1578
        %v1603 = vadd.f32 %v1455, %v1578
        %v1604 = vadd.f32 %v1470, %v1578
        %v1605 = vadd.f32 %v1485, %v1578
        %v1606 = vadd.f32 %v1500, %v1578
        %v1607 = vadd.f32 %v1515, %v1578
        %v1608 = vadd.f32 %v1530, %v1578
        %v1609 = vadd.f32 %v1545, %v1578
        %v1610 = vadd.f32 %v1560, %v1578
        %v1611 = vadd.f32 %v1575, %v1578
        %v1612 = vpack.c.bf16 %v1581, %v1580
        %v1613 = vpack.c.bf16 %v1583, %v1582
        %v1614 = vpack.c.bf16 %v1585, %v1584
        %v1615 = vpack.c.bf16 %v1587, %v1586
        %v1616 = vpack.c.bf16 %v1589, %v1588
        %v1617 = vpack.c.bf16 %v1591, %v1590
        %v1618 = vpack.c.bf16 %v1593, %v1592
        %v1619 = vpack.c.bf16 %v1595, %v1594
        %v1620 = vpack.c.bf16 %v1597, %v1596
        %v1621 = vpack.c.bf16 %v1599, %v1598
        %v1622 = vpack.c.bf16 %v1601, %v1600
        %v1623 = vpack.c.bf16 %v1603, %v1602
        %v1624 = vpack.c.bf16 %v1605, %v1604
        %v1625 = vpack.c.bf16 %v1607, %v1606
        %v1626 = vpack.c.bf16 %v1609, %v1608
        %v1627 = vpack.c.bf16 %v1611, %v1610
        %v1628 = vld [vmem:[#allocation5] sm:$0xff]
        %v1629 = vld [vmem:[#allocation5 + $0x8] sm:$0xff]
        %v1630 = vld [vmem:[#allocation5 + $0x10] sm:$0xff]
        %v1631 = vld [vmem:[#allocation5 + $0x18] sm:$0xff]
        %v1632 = vld [vmem:[#allocation5 + $0x20] sm:$0xff]
        %v1633 = vld [vmem:[#allocation5 + $0x28] sm:$0xff]
        %v1634 = vld [vmem:[#allocation5 + $0x30] sm:$0xff]
        %v1635 = vld [vmem:[#allocation5 + $0x38] sm:$0xff]
        %v1636 = vld [vmem:[#allocation5 + $0x40] sm:$0xff]
        %v1637 = vld [vmem:[#allocation5 + $0x48] sm:$0xff]
        %v1638 = vld [vmem:[#allocation5 + $0x50] sm:$0xff]
        %v1639 = vld [vmem:[#allocation5 + $0x58] sm:$0xff]
        %v1640 = vld [vmem:[#allocation5 + $0x60] sm:$0xff]
        %v1641 = vld [vmem:[#allocation5 + $0x68] sm:$0xff]
        %v1642 = vld [vmem:[#allocation5 + $0x70] sm:$0xff]
        %v1643 = vld [vmem:[#allocation5 + $0x78] sm:$0xff]
        %v1644 = vld [vmem:[%s4] sm:$0x3]
        %v1646 = vperm.slane %v1644, 0
        %v1647 = vperm.slane %v1644, 1
        %v1666 = vunpack.c.l.b16 %v1628
        %v1667 = vunpack.c.h.b16 %v1628
        %v1668 = vunpack.c.l.b16 %v1629
        %v1669 = vunpack.c.h.b16 %v1629
        %v1670 = vunpack.c.l.b16 %v1630
        %v1671 = vunpack.c.h.b16 %v1630
        %v1672 = vunpack.c.l.b16 %v1631
        %v1673 = vunpack.c.h.b16 %v1631
        %v1674 = vunpack.c.l.b16 %v1632
        %v1675 = vunpack.c.h.b16 %v1632
        %v1676 = vunpack.c.l.b16 %v1633
        %v1677 = vunpack.c.h.b16 %v1633
        %v1678 = vunpack.c.l.b16 %v1634
        %v1679 = vunpack.c.h.b16 %v1634
        %v1680 = vunpack.c.l.b16 %v1635
        %v1681 = vunpack.c.h.b16 %v1635
        %v1682 = vunpack.c.l.b16 %v1636
        %v1683 = vunpack.c.h.b16 %v1636
        %v1684 = vunpack.c.l.b16 %v1637
        %v1685 = vunpack.c.h.b16 %v1637
        %v1686 = vunpack.c.l.b16 %v1638
        %v1687 = vunpack.c.h.b16 %v1638
        %v1688 = vunpack.c.l.b16 %v1639
        %v1689 = vunpack.c.h.b16 %v1639
        %v1690 = vunpack.c.l.b16 %v1640
        %v1691 = vunpack.c.h.b16 %v1640
        %v1692 = vunpack.c.l.b16 %v1641
        %v1693 = vunpack.c.h.b16 %v1641
        %v1694 = vunpack.c.l.b16 %v1642
        %v1695 = vunpack.c.h.b16 %v1642
        %v1696 = vunpack.c.l.b16 %v1643
        %v1697 = vunpack.c.h.b16 %v1643
        %v1698 = vpack.c.b16 %v1668, %v1666
        %v1699 = vpack.c.b16 %v1669, %v1667
        %v1700 = vpack.c.b16 %v1672, %v1670
        %v1701 = vpack.c.b16 %v1673, %v1671
        %v1702 = vpack.c.b16 %v1676, %v1674
        %v1703 = vpack.c.b16 %v1677, %v1675
        %v1704 = vpack.c.b16 %v1680, %v1678
        %v1705 = vpack.c.b16 %v1681, %v1679
        %v1706 = vpack.c.b16 %v1684, %v1682
        %v1707 = vpack.c.b16 %v1685, %v1683
        %v1708 = vpack.c.b16 %v1688, %v1686
        %v1709 = vpack.c.b16 %v1689, %v1687
        %v1710 = vpack.c.b16 %v1692, %v1690
        %v1711 = vpack.c.b16 %v1693, %v1691
        %v1712 = vpack.c.b16 %v1696, %v1694
        %v1713 = vpack.c.b16 %v1697, %v1695
        %1730 = vmatpush.bf16.msra.mxu0 %v1712
        %1731 = vmatpush.bf16.msra.mxu0 %v1710
        %1732 = vmatpush.bf16.msra.mxu0 %v1708
        %1733 = vmatpush.bf16.msra.mxu0 %v1706
        %1734 = vmatpush.bf16.msra.mxu0 %v1704
        %1735 = vmatpush.bf16.msra.mxu0 %v1702
        %1736 = vmatpush.bf16.msra.mxu0 %v1700
        %1737 = vmatpush.bf16.msra.mxu0 %v1698
        %1738 = vmatmul.bf16.gmra.mxu0 %v1612
        %v1739 = vpop.f32.mrf.mxu0
        %v1740 = vadd.f32 %v1646, %v1739
        %v1741 = vpop.f32.mrf.mxu0
        %v1742 = vadd.f32 %v1646, %v1741
        %1743 = vmatmul.bf16.gmra.mxu0 %v1613
        %v1744 = vpop.f32.mrf.mxu0
        %v1745 = vadd.f32 %v1646, %v1744
        %v1746 = vpop.f32.mrf.mxu0
        %v1747 = vadd.f32 %v1646, %v1746
        %1748 = vmatmul.bf16.gmra.mxu0 %v1614
        %v1749 = vpop.f32.mrf.mxu0
        %v1750 = vadd.f32 %v1646, %v1749
        %v1751 = vpop.f32.mrf.mxu0
        %v1752 = vadd.f32 %v1646, %v1751
        %1753 = vmatmul.bf16.gmra.mxu0 %v1615
        %v1754 = vpop.f32.mrf.mxu0
        %v1755 = vadd.f32 %v1646, %v1754
        %v1756 = vpop.f32.mrf.mxu0
        %v1757 = vadd.f32 %v1646, %v1756
        %1758 = vmatmul.bf16.gmra.mxu0 %v1616
        %v1759 = vpop.f32.mrf.mxu0
        %v1760 = vadd.f32 %v1646, %v1759
        %v1761 = vpop.f32.mrf.mxu0
        %v1762 = vadd.f32 %v1646, %v1761
        %1763 = vmatmul.bf16.gmra.mxu0 %v1617
        %v1764 = vpop.f32.mrf.mxu0
        %v1765 = vadd.f32 %v1646, %v1764
        %v1766 = vpop.f32.mrf.mxu0
        %v1767 = vadd.f32 %v1646, %v1766
        %1768 = vmatmul.bf16.gmra.mxu0 %v1618
        %v1769 = vpop.f32.mrf.mxu0
        %v1770 = vadd.f32 %v1646, %v1769
        %v1771 = vpop.f32.mrf.mxu0
        %v1772 = vadd.f32 %v1646, %v1771
        %1773 = vmatmul.bf16.gmra.mxu0 %v1619
        %v1774 = vpop.f32.mrf.mxu0
        %v1775 = vadd.f32 %v1646, %v1774
        %v1776 = vpop.f32.mrf.mxu0
        %v1777 = vadd.f32 %v1646, %v1776
        %1778 = vmatmul.bf16.gmra.mxu0 %v1620
        %v1779 = vpop.f32.mrf.mxu0
        %v1780 = vadd.f32 %v1646, %v1779
        %v1781 = vpop.f32.mrf.mxu0
        %v1782 = vadd.f32 %v1646, %v1781
        %1783 = vmatmul.bf16.gmra.mxu0 %v1621
        %v1784 = vpop.f32.mrf.mxu0
        %v1785 = vadd.f32 %v1646, %v1784
        %v1786 = vpop.f32.mrf.mxu0
        %v1787 = vadd.f32 %v1646, %v1786
        %1788 = vmatmul.bf16.gmra.mxu0 %v1622
        %v1789 = vpop.f32.mrf.mxu0
        %v1790 = vadd.f32 %v1646, %v1789
        %v1791 = vpop.f32.mrf.mxu0
        %v1792 = vadd.f32 %v1646, %v1791
        %1793 = vmatmul.bf16.gmra.mxu0 %v1623
        %v1794 = vpop.f32.mrf.mxu0
        %v1795 = vadd.f32 %v1646, %v1794
        %v1796 = vpop.f32.mrf.mxu0
        %v1797 = vadd.f32 %v1646, %v1796
        %1798 = vmatmul.bf16.gmra.mxu0 %v1624
        %v1799 = vpop.f32.mrf.mxu0
        %v1800 = vadd.f32 %v1646, %v1799
        %v1801 = vpop.f32.mrf.mxu0
        %v1802 = vadd.f32 %v1646, %v1801
        %1803 = vmatmul.bf16.gmra.mxu0 %v1625
        %v1804 = vpop.f32.mrf.mxu0
        %v1805 = vadd.f32 %v1646, %v1804
        %v1806 = vpop.f32.mrf.mxu0
        %v1807 = vadd.f32 %v1646, %v1806
        %1808 = vmatmul.bf16.gmra.mxu0 %v1626
        %v1809 = vpop.f32.mrf.mxu0
        %v1810 = vadd.f32 %v1646, %v1809
        %v1811 = vpop.f32.mrf.mxu0
        %v1812 = vadd.f32 %v1646, %v1811
        %1813 = vmatmul.bf16.gmra.mxu0 %v1627
        %v1814 = vpop.f32.mrf.mxu0
        %v1815 = vadd.f32 %v1646, %v1814
        %v1816 = vpop.f32.mrf.mxu0
        %v1817 = vadd.f32 %v1646, %v1816
        %1818 = vdwg.mxu0
        %1819 = vmatpush.bf16.msra.mxu0 %v1713
        %1820 = vmatpush.bf16.msra.mxu0 %v1711
        %1821 = vmatpush.bf16.msra.mxu0 %v1709
        %1822 = vmatpush.bf16.msra.mxu0 %v1707
        %1823 = vmatpush.bf16.msra.mxu0 %v1705
        %1824 = vmatpush.bf16.msra.mxu0 %v1703
        %1825 = vmatpush.bf16.msra.mxu0 %v1701
        %1826 = vmatpush.bf16.msra.mxu0 %v1699
        %1827 = vmatmul.bf16.gmra.mxu0 %v1612
        %v1828 = vpop.f32.mrf.mxu0
        %v1829 = vadd.f32 %v1647, %v1828
        %v1830 = vpop.f32.mrf.mxu0
        %v1831 = vadd.f32 %v1647, %v1830
        %1832 = vmatmul.bf16.gmra.mxu0 %v1613
        %v1833 = vpop.f32.mrf.mxu0
        %v1834 = vadd.f32 %v1647, %v1833
        %v1835 = vpop.f32.mrf.mxu0
        %v1836 = vadd.f32 %v1647, %v1835
        %1837 = vmatmul.bf16.gmra.mxu0 %v1614
        %v1838 = vpop.f32.mrf.mxu0
        %v1839 = vadd.f32 %v1647, %v1838
        %v1840 = vpop.f32.mrf.mxu0
        %v1841 = vadd.f32 %v1647, %v1840
        %1842 = vmatmul.bf16.gmra.mxu0 %v1615
        %v1843 = vpop.f32.mrf.mxu0
        %v1844 = vadd.f32 %v1647, %v1843
        %v1845 = vpop.f32.mrf.mxu0
        %v1846 = vadd.f32 %v1647, %v1845
        %1847 = vmatmul.bf16.gmra.mxu0 %v1616
        %v1848 = vpop.f32.mrf.mxu0
        %v1849 = vadd.f32 %v1647, %v1848
        %v1850 = vpop.f32.mrf.mxu0
        %v1851 = vadd.f32 %v1647, %v1850
        %1852 = vmatmul.bf16.gmra.mxu0 %v1617
        %v1853 = vpop.f32.mrf.mxu0
        %v1854 = vadd.f32 %v1647, %v1853
        %v1855 = vpop.f32.mrf.mxu0
        %v1856 = vadd.f32 %v1647, %v1855
        %1857 = vmatmul.bf16.gmra.mxu0 %v1618
        %v1858 = vpop.f32.mrf.mxu0
        %v1859 = vadd.f32 %v1647, %v1858
        %v1860 = vpop.f32.mrf.mxu0
        %v1861 = vadd.f32 %v1647, %v1860
        %1862 = vmatmul.bf16.gmra.mxu0 %v1619
        %v1863 = vpop.f32.mrf.mxu0
        %v1864 = vadd.f32 %v1647, %v1863
        %v1865 = vpop.f32.mrf.mxu0
        %v1866 = vadd.f32 %v1647, %v1865
        %1867 = vmatmul.bf16.gmra.mxu0 %v1620
        %v1868 = vpop.f32.mrf.mxu0
        %v1869 = vadd.f32 %v1647, %v1868
        %v1870 = vpop.f32.mrf.mxu0
        %v1871 = vadd.f32 %v1647, %v1870
        %1872 = vmatmul.bf16.gmra.mxu0 %v1621
        %v1873 = vpop.f32.mrf.mxu0
        %v1874 = vadd.f32 %v1647, %v1873
        %v1875 = vpop.f32.mrf.mxu0
        %v1876 = vadd.f32 %v1647, %v1875
        %1877 = vmatmul.bf16.gmra.mxu0 %v1622
        %v1878 = vpop.f32.mrf.mxu0
        %v1879 = vadd.f32 %v1647, %v1878
        %v1880 = vpop.f32.mrf.mxu0
        %v1881 = vadd.f32 %v1647, %v1880
        %1882 = vmatmul.bf16.gmra.mxu0 %v1623
        %v1883 = vpop.f32.mrf.mxu0
        %v1884 = vadd.f32 %v1647, %v1883
        %v1885 = vpop.f32.mrf.mxu0
        %v1886 = vadd.f32 %v1647, %v1885
        %1887 = vmatmul.bf16.gmra.mxu0 %v1624
        %v1888 = vpop.f32.mrf.mxu0
        %v1889 = vadd.f32 %v1647, %v1888
        %v1890 = vpop.f32.mrf.mxu0
        %v1891 = vadd.f32 %v1647, %v1890
        %1892 = vmatmul.bf16.gmra.mxu0 %v1625
        %v1893 = vpop.f32.mrf.mxu0
        %v1894 = vadd.f32 %v1647, %v1893
        %v1895 = vpop.f32.mrf.mxu0
        %v1896 = vadd.f32 %v1647, %v1895
        %1897 = vmatmul.bf16.gmra.mxu0 %v1626
        %v1898 = vpop.f32.mrf.mxu0
        %v1899 = vadd.f32 %v1647, %v1898
        %v1900 = vpop.f32.mrf.mxu0
        %v1901 = vadd.f32 %v1647, %v1900
        %1902 = vmatmul.bf16.gmra.mxu0 %v1627
        %v1903 = vpop.f32.mrf.mxu0
        %v1904 = vadd.f32 %v1647, %v1903
        %v1905 = vpop.f32.mrf.mxu0
        %v1906 = vadd.f32 %v1647, %v1905
        %1907 = vdwg.mxu0
        %v1908 = vmax.f32 %v1740, 0.0
        %v1909 = vmax.f32 %v1829, 0.0
        %v1910 = vmax.f32 %v1742, 0.0
        %v1911 = vmax.f32 %v1831, 0.0
        %v1912 = vmax.f32 %v1745, 0.0
        %v1913 = vmax.f32 %v1834, 0.0
        %v1914 = vmax.f32 %v1747, 0.0
        %v1915 = vmax.f32 %v1836, 0.0
        %v1916 = vmax.f32 %v1750, 0.0
        %v1917 = vmax.f32 %v1839, 0.0
        %v1918 = vmax.f32 %v1752, 0.0
        %v1919 = vmax.f32 %v1841, 0.0
        %v1920 = vmax.f32 %v1755, 0.0
        %v1921 = vmax.f32 %v1844, 0.0
        %v1922 = vmax.f32 %v1757, 0.0
        %v1923 = vmax.f32 %v1846, 0.0
        %v1924 = vmax.f32 %v1760, 0.0
        %v1925 = vmax.f32 %v1849, 0.0
        %v1926 = vmax.f32 %v1762, 0.0
        %v1927 = vmax.f32 %v1851, 0.0
        %v1928 = vmax.f32 %v1765, 0.0
        %v1929 = vmax.f32 %v1854, 0.0
        %v1930 = vmax.f32 %v1767, 0.0
        %v1931 = vmax.f32 %v1856, 0.0
        %v1932 = vmax.f32 %v1770, 0.0
        %v1933 = vmax.f32 %v1859, 0.0
        %v1934 = vmax.f32 %v1772, 0.0
        %v1935 = vmax.f32 %v1861, 0.0
        %v1936 = vmax.f32 %v1775, 0.0
        %v1937 = vmax.f32 %v1864, 0.0
        %v1938 = vmax.f32 %v1777, 0.0
        %v1939 = vmax.f32 %v1866, 0.0
        %v1940 = vmax.f32 %v1780, 0.0
        %v1941 = vmax.f32 %v1869, 0.0
        %v1942 = vmax.f32 %v1782, 0.0
        %v1943 = vmax.f32 %v1871, 0.0
        %v1944 = vmax.f32 %v1785, 0.0
        %v1945 = vmax.f32 %v1874, 0.0
        %v1946 = vmax.f32 %v1787, 0.0
        %v1947 = vmax.f32 %v1876, 0.0
        %v1948 = vmax.f32 %v1790, 0.0
        %v1949 = vmax.f32 %v1879, 0.0
        %v1950 = vmax.f32 %v1792, 0.0
        %v1951 = vmax.f32 %v1881, 0.0
        %v1952 = vmax.f32 %v1795, 0.0
        %v1953 = vmax.f32 %v1884, 0.0
        %v1954 = vmax.f32 %v1797, 0.0
        %v1955 = vmax.f32 %v1886, 0.0
        %v1956 = vmax.f32 %v1800, 0.0
        %v1957 = vmax.f32 %v1889, 0.0
        %v1958 = vmax.f32 %v1802, 0.0
        %v1959 = vmax.f32 %v1891, 0.0
        %v1960 = vmax.f32 %v1805, 0.0
        %v1961 = vmax.f32 %v1894, 0.0
        %v1962 = vmax.f32 %v1807, 0.0
        %v1963 = vmax.f32 %v1896, 0.0
        %v1964 = vmax.f32 %v1810, 0.0
        %v1965 = vmax.f32 %v1899, 0.0
        %v1966 = vmax.f32 %v1812, 0.0
        %v1967 = vmax.f32 %v1901, 0.0
        %v1968 = vmax.f32 %v1815, 0.0
        %v1969 = vmax.f32 %v1904, 0.0
        %v1970 = vmax.f32 %v1817, 0.0
        %v1971 = vmax.f32 %v1906, 0.0
        %v1972 = vpack.c.bf16 %v1910, %v1908
        %v1973 = vpack.c.bf16 %v1911, %v1909
        %v1974 = vpack.c.bf16 %v1914, %v1912
        %v1975 = vpack.c.bf16 %v1915, %v1913
        %v1976 = vpack.c.bf16 %v1918, %v1916
        %v1977 = vpack.c.bf16 %v1919, %v1917
        %v1978 = vpack.c.bf16 %v1922, %v1920
        %v1979 = vpack.c.bf16 %v1923, %v1921
        %v1980 = vpack.c.bf16 %v1926, %v1924
        %v1981 = vpack.c.bf16 %v1927, %v1925
        %v1982 = vpack.c.bf16 %v1930, %v1928
        %v1983 = vpack.c.bf16 %v1931, %v1929
        %v1984 = vpack.c.bf16 %v1934, %v1932
        %v1985 = vpack.c.bf16 %v1935, %v1933
        %v1986 = vpack.c.bf16 %v1938, %v1936
        %v1987 = vpack.c.bf16 %v1939, %v1937
        %v1988 = vpack.c.bf16 %v1942, %v1940
        %v1989 = vpack.c.bf16 %v1943, %v1941
        %v1990 = vpack.c.bf16 %v1946, %v1944
        %v1991 = vpack.c.bf16 %v1947, %v1945
        %v1992 = vpack.c.bf16 %v1950, %v1948
        %v1993 = vpack.c.bf16 %v1951, %v1949
        %v1994 = vpack.c.bf16 %v1954, %v1952
        %v1995 = vpack.c.bf16 %v1955, %v1953
        %v1996 = vpack.c.bf16 %v1958, %v1956
        %v1997 = vpack.c.bf16 %v1959, %v1957
        %v1998 = vpack.c.bf16 %v1962, %v1960
        %v1999 = vpack.c.bf16 %v1963, %v1961
        %v2000 = vpack.c.bf16 %v1966, %v1964
        %v2001 = vpack.c.bf16 %v1967, %v1965
        %v2002 = vpack.c.bf16 %v1970, %v1968
        %v2003 = vpack.c.bf16 %v1971, %v1969
        %v2004 = vld [vmem:[#allocation7] sm:$0xf]
        %v2005 = vld [vmem:[#allocation7 + $0x4] sm:$0xf]
        %v2006 = vld [vmem:[#allocation7 + $0x8] sm:$0xf]
        %v2007 = vld [vmem:[#allocation7 + $0xc] sm:$0xf]
        %v2008 = vld [vmem:[#allocation7 + $0x10] sm:$0xf]
        %v2009 = vld [vmem:[#allocation7 + $0x14] sm:$0xf]
        %v2010 = vld [vmem:[#allocation7 + $0x18] sm:$0xf]
        %v2011 = vld [vmem:[#allocation7 + $0x1c] sm:$0xf]
        %v2012 = vld [vmem:[#allocation7 + $0x20] sm:$0xf]
        %v2013 = vld [vmem:[#allocation7 + $0x24] sm:$0xf]
        %v2014 = vld [vmem:[#allocation7 + $0x28] sm:$0xf]
        %v2015 = vld [vmem:[#allocation7 + $0x2c] sm:$0xf]
        %v2016 = vld [vmem:[#allocation7 + $0x30] sm:$0xf]
        %v2017 = vld [vmem:[#allocation7 + $0x34] sm:$0xf]
        %v2018 = vld [vmem:[#allocation7 + $0x38] sm:$0xf]
        %v2019 = vld [vmem:[#allocation7 + $0x3c] sm:$0xf]
        %v2020 = vld [vmem:[#allocation7 + $0x40] sm:$0xf]
        %v2021 = vld [vmem:[#allocation7 + $0x44] sm:$0xf]
        %v2022 = vld [vmem:[#allocation7 + $0x48] sm:$0xf]
        %v2023 = vld [vmem:[#allocation7 + $0x4c] sm:$0xf]
        %v2024 = vld [vmem:[#allocation7 + $0x50] sm:$0xf]
        %v2025 = vld [vmem:[#allocation7 + $0x54] sm:$0xf]
        %v2026 = vld [vmem:[#allocation7 + $0x58] sm:$0xf]
        %v2027 = vld [vmem:[#allocation7 + $0x5c] sm:$0xf]
        %v2028 = vld [vmem:[#allocation7 + $0x60] sm:$0xf]
        %v2029 = vld [vmem:[#allocation7 + $0x64] sm:$0xf]
        %v2030 = vld [vmem:[#allocation7 + $0x68] sm:$0xf]
        %v2031 = vld [vmem:[#allocation7 + $0x6c] sm:$0xf]
        %v2032 = vld [vmem:[#allocation7 + $0x70] sm:$0xf]
        %v2033 = vld [vmem:[#allocation7 + $0x74] sm:$0xf]
        %v2034 = vld [vmem:[#allocation7 + $0x78] sm:$0xf]
        %v2035 = vld [vmem:[#allocation7 + $0x7c] sm:$0xf]
        %v2036 = vld [vmem:[#allocation8] sm:$0x1]
        %v2038 = vperm.slane %v2036, 0
        %v2072 = vunpack.c.l.b16 %v2004
        %v2073 = vunpack.c.l.b16 %v2005
        %v2074 = vunpack.c.l.b16 %v2006
        %v2075 = vunpack.c.l.b16 %v2007
        %v2076 = vunpack.c.l.b16 %v2008
        %v2077 = vunpack.c.l.b16 %v2009
        %v2078 = vunpack.c.l.b16 %v2010
        %v2079 = vunpack.c.l.b16 %v2011
        %v2080 = vunpack.c.l.b16 %v2012
        %v2081 = vunpack.c.l.b16 %v2013
        %v2082 = vunpack.c.l.b16 %v2014
        %v2083 = vunpack.c.l.b16 %v2015
        %v2084 = vunpack.c.l.b16 %v2016
        %v2085 = vunpack.c.l.b16 %v2017
        %v2086 = vunpack.c.l.b16 %v2018
        %v2087 = vunpack.c.l.b16 %v2019
        %v2088 = vunpack.c.l.b16 %v2020
        %v2089 = vunpack.c.l.b16 %v2021
        %v2090 = vunpack.c.l.b16 %v2022
        %v2091 = vunpack.c.l.b16 %v2023
        %v2092 = vunpack.c.l.b16 %v2024
        %v2093 = vunpack.c.l.b16 %v2025
        %v2094 = vunpack.c.l.b16 %v2026
        %v2095 = vunpack.c.l.b16 %v2027
        %v2096 = vunpack.c.l.b16 %v2028
        %v2097 = vunpack.c.l.b16 %v2029
        %v2098 = vunpack.c.l.b16 %v2030
        %v2099 = vunpack.c.l.b16 %v2031
        %v2100 = vunpack.c.l.b16 %v2032
        %v2101 = vunpack.c.l.b16 %v2033
        %v2102 = vunpack.c.l.b16 %v2034
        %v2103 = vunpack.c.l.b16 %v2035
        %v2104 = vpack.c.b16 %v2073, %v2072
        %v2105 = vpack.c.b16 %v2075, %v2074
        %v2106 = vpack.c.b16 %v2077, %v2076
        %v2107 = vpack.c.b16 %v2079, %v2078
        %v2108 = vpack.c.b16 %v2081, %v2080
        %v2109 = vpack.c.b16 %v2083, %v2082
        %v2110 = vpack.c.b16 %v2085, %v2084
        %v2111 = vpack.c.b16 %v2087, %v2086
        %v2112 = vpack.c.b16 %v2089, %v2088
        %v2113 = vpack.c.b16 %v2091, %v2090
        %v2114 = vpack.c.b16 %v2093, %v2092
        %v2115 = vpack.c.b16 %v2095, %v2094
        %v2116 = vpack.c.b16 %v2097, %v2096
        %v2117 = vpack.c.b16 %v2099, %v2098
        %v2118 = vpack.c.b16 %v2101, %v2100
        %v2119 = vpack.c.b16 %v2103, %v2102
        %2136 = vmatpush.bf16.msra.mxu0 %v2111
        %2137 = vmatpush.bf16.msra.mxu0 %v2110
        %2138 = vmatpush.bf16.msra.mxu0 %v2109
        %2139 = vmatpush.bf16.msra.mxu0 %v2108
        %2140 = vmatpush.bf16.msra.mxu0 %v2107
        %2141 = vmatpush.bf16.msra.mxu0 %v2106
        %2142 = vmatpush.bf16.msra.mxu0 %v2105
        %2143 = vmatpush.bf16.msra.mxu0 %v2104
        %2144 = vmatmul.bf16.gmra.mxu0 %v1972
        %v2145 = vpop.f32.mrf.mxu0
        %v2146 = vadd.f32 %v2038, %v2145
        %v2147 = vpop.f32.mrf.mxu0
        %v2148 = vadd.f32 %v2038, %v2147
        %2149 = vmatmul.bf16.gmra.mxu0 %v1974
        %v2150 = vpop.f32.mrf.mxu0
        %v2151 = vadd.f32 %v2038, %v2150
        %v2152 = vpop.f32.mrf.mxu0
        %v2153 = vadd.f32 %v2038, %v2152
        %2154 = vmatmul.bf16.gmra.mxu0 %v1976
        %v2155 = vpop.f32.mrf.mxu0
        %v2156 = vadd.f32 %v2038, %v2155
        %v2157 = vpop.f32.mrf.mxu0
        %v2158 = vadd.f32 %v2038, %v2157
        %2159 = vmatmul.bf16.gmra.mxu0 %v1978
        %v2160 = vpop.f32.mrf.mxu0
        %v2161 = vadd.f32 %v2038, %v2160
        %v2162 = vpop.f32.mrf.mxu0
        %v2163 = vadd.f32 %v2038, %v2162
        %2164 = vmatmul.bf16.gmra.mxu0 %v1980
        %v2165 = vpop.f32.mrf.mxu0
        %v2166 = vadd.f32 %v2038, %v2165
        %v2167 = vpop.f32.mrf.mxu0
        %v2168 = vadd.f32 %v2038, %v2167
        %2169 = vmatmul.bf16.gmra.mxu0 %v1982
        %v2170 = vpop.f32.mrf.mxu0
        %v2171 = vadd.f32 %v2038, %v2170
        %v2172 = vpop.f32.mrf.mxu0
        %v2173 = vadd.f32 %v2038, %v2172
        %2174 = vmatmul.bf16.gmra.mxu0 %v1984
        %v2175 = vpop.f32.mrf.mxu0
        %v2176 = vadd.f32 %v2038, %v2175
        %v2177 = vpop.f32.mrf.mxu0
        %v2178 = vadd.f32 %v2038, %v2177
        %2179 = vmatmul.bf16.gmra.mxu0 %v1986
        %v2180 = vpop.f32.mrf.mxu0
        %v2181 = vadd.f32 %v2038, %v2180
        %v2182 = vpop.f32.mrf.mxu0
        %v2183 = vadd.f32 %v2038, %v2182
        %2184 = vmatmul.bf16.gmra.mxu0 %v1988
        %v2185 = vpop.f32.mrf.mxu0
        %v2186 = vadd.f32 %v2038, %v2185
        %v2187 = vpop.f32.mrf.mxu0
        %v2188 = vadd.f32 %v2038, %v2187
        %2189 = vmatmul.bf16.gmra.mxu0 %v1990
        %v2190 = vpop.f32.mrf.mxu0
        %v2191 = vadd.f32 %v2038, %v2190
        %v2192 = vpop.f32.mrf.mxu0
        %v2193 = vadd.f32 %v2038, %v2192
        %2194 = vmatmul.bf16.gmra.mxu0 %v1992
        %v2195 = vpop.f32.mrf.mxu0
        %v2196 = vadd.f32 %v2038, %v2195
        %v2197 = vpop.f32.mrf.mxu0
        %v2198 = vadd.f32 %v2038, %v2197
        %2199 = vmatmul.bf16.gmra.mxu0 %v1994
        %v2200 = vpop.f32.mrf.mxu0
        %v2201 = vadd.f32 %v2038, %v2200
        %v2202 = vpop.f32.mrf.mxu0
        %v2203 = vadd.f32 %v2038, %v2202
        %2204 = vmatmul.bf16.gmra.mxu0 %v1996
        %v2205 = vpop.f32.mrf.mxu0
        %v2206 = vadd.f32 %v2038, %v2205
        %v2207 = vpop.f32.mrf.mxu0
        %v2208 = vadd.f32 %v2038, %v2207
        %2209 = vmatmul.bf16.gmra.mxu0 %v1998
        %v2210 = vpop.f32.mrf.mxu0
        %v2211 = vadd.f32 %v2038, %v2210
        %v2212 = vpop.f32.mrf.mxu0
        %v2213 = vadd.f32 %v2038, %v2212
        %2214 = vmatmul.bf16.gmra.mxu0 %v2000
        %v2215 = vpop.f32.mrf.mxu0
        %v2216 = vadd.f32 %v2038, %v2215
        %v2217 = vpop.f32.mrf.mxu0
        %v2218 = vadd.f32 %v2038, %v2217
        %2219 = vmatmul.bf16.gmra.mxu0 %v2002
        %v2220 = vpop.f32.mrf.mxu0
        %v2221 = vadd.f32 %v2038, %v2220
        %v2222 = vpop.f32.mrf.mxu0
        %v2223 = vadd.f32 %v2038, %v2222
        %2224 = vdwg.mxu0
        %2225 = vmatpush.bf16.msra.mxu0 %v2119
        %2226 = vmatpush.bf16.msra.mxu0 %v2118
        %2227 = vmatpush.bf16.msra.mxu0 %v2117
        %2228 = vmatpush.bf16.msra.mxu0 %v2116
        %2229 = vmatpush.bf16.msra.mxu0 %v2115
        %2230 = vmatpush.bf16.msra.mxu0 %v2114
        %2231 = vmatpush.bf16.msra.mxu0 %v2113
        %2232 = vmatpush.bf16.msra.mxu0 %v2112
        %2233 = vmatmul.bf16.gmra.mxu0 %v1973
        %v2234 = vpop.f32.mrf.mxu0
        %v2235 = vadd.f32 %v2146, %v2234
        %v2236 = vpop.f32.mrf.mxu0
        %v2237 = vadd.f32 %v2148, %v2236
        %2238 = vmatmul.bf16.gmra.mxu0 %v1975
        %v2239 = vpop.f32.mrf.mxu0
        %v2240 = vadd.f32 %v2151, %v2239
        %v2241 = vpop.f32.mrf.mxu0
        %v2242 = vadd.f32 %v2153, %v2241
        %2243 = vmatmul.bf16.gmra.mxu0 %v1977
        %v2244 = vpop.f32.mrf.mxu0
        %v2245 = vadd.f32 %v2156, %v2244
        %v2246 = vpop.f32.mrf.mxu0
        %v2247 = vadd.f32 %v2158, %v2246
        %2248 = vmatmul.bf16.gmra.mxu0 %v1979
        %v2249 = vpop.f32.mrf.mxu0
        %v2250 = vadd.f32 %v2161, %v2249
        %v2251 = vpop.f32.mrf.mxu0
        %v2252 = vadd.f32 %v2163, %v2251
        %2253 = vmatmul.bf16.gmra.mxu0 %v1981
        %v2254 = vpop.f32.mrf.mxu0
        %v2255 = vadd.f32 %v2166, %v2254
        %v2256 = vpop.f32.mrf.mxu0
        %v2257 = vadd.f32 %v2168, %v2256
        %2258 = vmatmul.bf16.gmra.mxu0 %v1983
        %v2259 = vpop.f32.mrf.mxu0
        %v2260 = vadd.f32 %v2171, %v2259
        %v2261 = vpop.f32.mrf.mxu0
        %v2262 = vadd.f32 %v2173, %v2261
        %2263 = vmatmul.bf16.gmra.mxu0 %v1985
        %v2264 = vpop.f32.mrf.mxu0
        %v2265 = vadd.f32 %v2176, %v2264
        %v2266 = vpop.f32.mrf.mxu0
        %v2267 = vadd.f32 %v2178, %v2266
        %2268 = vmatmul.bf16.gmra.mxu0 %v1987
        %v2269 = vpop.f32.mrf.mxu0
        %v2270 = vadd.f32 %v2181, %v2269
        %v2271 = vpop.f32.mrf.mxu0
        %v2272 = vadd.f32 %v2183, %v2271
        %2273 = vmatmul.bf16.gmra.mxu0 %v1989
        %v2274 = vpop.f32.mrf.mxu0
        %v2275 = vadd.f32 %v2186, %v2274
        %v2276 = vpop.f32.mrf.mxu0
        %v2277 = vadd.f32 %v2188, %v2276
        %2278 = vmatmul.bf16.gmra.mxu0 %v1991
        %v2279 = vpop.f32.mrf.mxu0
        %v2280 = vadd.f32 %v2191, %v2279
        %v2281 = vpop.f32.mrf.mxu0
        %v2282 = vadd.f32 %v2193, %v2281
        %2283 = vmatmul.bf16.gmra.mxu0 %v1993
        %v2284 = vpop.f32.mrf.mxu0
        %v2285 = vadd.f32 %v2196, %v2284
        %v2286 = vpop.f32.mrf.mxu0
        %v2287 = vadd.f32 %v2198, %v2286
        %2288 = vmatmul.bf16.gmra.mxu0 %v1995
        %v2289 = vpop.f32.mrf.mxu0
        %v2290 = vadd.f32 %v2201, %v2289
        %v2291 = vpop.f32.mrf.mxu0
        %v2292 = vadd.f32 %v2203, %v2291
        %2293 = vmatmul.bf16.gmra.mxu0 %v1997
        %v2294 = vpop.f32.mrf.mxu0
        %v2295 = vadd.f32 %v2206, %v2294
        %v2296 = vpop.f32.mrf.mxu0
        %v2297 = vadd.f32 %v2208, %v2296
        %2298 = vmatmul.bf16.gmra.mxu0 %v1999
        %v2299 = vpop.f32.mrf.mxu0
        %v2300 = vadd.f32 %v2211, %v2299
        %v2301 = vpop.f32.mrf.mxu0
        %v2302 = vadd.f32 %v2213, %v2301
        %2303 = vmatmul.bf16.gmra.mxu0 %v2001
        %v2304 = vpop.f32.mrf.mxu0
        %v2305 = vadd.f32 %v2216, %v2304
        %v2306 = vpop.f32.mrf.mxu0
        %v2307 = vadd.f32 %v2218, %v2306
        %2308 = vmatmul.bf16.gmra.mxu0 %v2003
        %v2309 = vpop.f32.mrf.mxu0
        %v2310 = vadd.f32 %v2221, %v2309
        %v2311 = vpop.f32.mrf.mxu0
        %v2312 = vadd.f32 %v2223, %v2311
        %2313 = vdwg.mxu0
        %v2314 = vadd.f32 %v349, %v2235
        %v2315 = vadd.f32 %v350, %v2237
        %v2316 = vadd.f32 %v351, %v2240
        %v2317 = vadd.f32 %v352, %v2242
        %v2318 = vadd.f32 %v353, %v2245
        %v2319 = vadd.f32 %v354, %v2247
        %v2320 = vadd.f32 %v355, %v2250
        %v2321 = vadd.f32 %v356, %v2252
        %v2322 = vadd.f32 %v357, %v2255
        %v2323 = vadd.f32 %v358, %v2257
        %v2324 = vadd.f32 %v359, %v2260
        %v2325 = vadd.f32 %v360, %v2262
        %v2326 = vadd.f32 %v361, %v2265
        %v2327 = vadd.f32 %v362, %v2267
        %v2328 = vadd.f32 %v363, %v2270
        %v2329 = vadd.f32 %v364, %v2272
        %v2330 = vadd.f32 %v365, %v2275
        %v2331 = vadd.f32 %v366, %v2277
        %v2332 = vadd.f32 %v367, %v2280
        %v2333 = vadd.f32 %v368, %v2282
        %v2334 = vadd.f32 %v369, %v2285
        %v2335 = vadd.f32 %v370, %v2287
        %v2336 = vadd.f32 %v371, %v2290
        %v2337 = vadd.f32 %v372, %v2292
        %v2338 = vadd.f32 %v373, %v2295
        %v2339 = vadd.f32 %v374, %v2297
        %v2340 = vadd.f32 %v375, %v2300
        %v2341 = vadd.f32 %v376, %v2302
        %v2342 = vadd.f32 %v377, %v2305
        %v2343 = vadd.f32 %v378, %v2307
        %v2344 = vadd.f32 %v379, %v2310
        %v2345 = vadd.f32 %v380, %v2312
        %2346 = vst [vmem:[%s346] sm:$0xff] %v2314
        %2347 = vst [vmem:[%s346 + $0x8] sm:$0xff] %v2315
        %2348 = vst [vmem:[%s346 + $0x10] sm:$0xff] %v2316
        %2349 = vst [vmem:[%s346 + $0x18] sm:$0xff] %v2317
        %2350 = vst [vmem:[%s346 + $0x20] sm:$0xff] %v2318
        %2351 = vst [vmem:[%s346 + $0x28] sm:$0xff] %v2319
        %2352 = vst [vmem:[%s346 + $0x30] sm:$0xff] %v2320
        %2353 = vst [vmem:[%s346 + $0x38] sm:$0xff] %v2321
        %2354 = vst [vmem:[%s346 + $0x40] sm:$0xff] %v2322
        %2355 = vst [vmem:[%s346 + $0x48] sm:$0xff] %v2323
        %2356 = vst [vmem:[%s346 + $0x50] sm:$0xff] %v2324
        %2357 = vst [vmem:[%s346 + $0x58] sm:$0xff] %v2325
        %2358 = vst [vmem:[%s346 + $0x60] sm:$0xff] %v2326
        %2359 = vst [vmem:[%s346 + $0x68] sm:$0xff] %v2327
        %2360 = vst [vmem:[%s346 + $0x70] sm:$0xff] %v2328
        %2361 = vst [vmem:[%s346 + $0x78] sm:$0xff] %v2329
        %2362 = vst [vmem:[%s346 + $0x80] sm:$0xff] %v2330
        %2363 = vst [vmem:[%s346 + $0x88] sm:$0xff] %v2331
        %2364 = vst [vmem:[%s346 + $0x90] sm:$0xff] %v2332
        %2365 = vst [vmem:[%s346 + $0x98] sm:$0xff] %v2333
        %2366 = vst [vmem:[%s346 + $0xa0] sm:$0xff] %v2334
        %2367 = vst [vmem:[%s346 + $0xa8] sm:$0xff] %v2335
        %2368 = vst [vmem:[%s346 + $0xb0] sm:$0xff] %v2336
        %2369 = vst [vmem:[%s346 + $0xb8] sm:$0xff] %v2337
        %2370 = vst [vmem:[%s346 + $0xc0] sm:$0xff] %v2338
        %2371 = vst [vmem:[%s346 + $0xc8] sm:$0xff] %v2339
        %2372 = vst [vmem:[%s346 + $0xd0] sm:$0xff] %v2340
        %2373 = vst [vmem:[%s346 + $0xd8] sm:$0xff] %v2341
        %2374 = vst [vmem:[%s346 + $0xe0] sm:$0xff] %v2342
        %2375 = vst [vmem:[%s346 + $0xe8] sm:$0xff] %v2343
        %2376 = vst [vmem:[%s346 + $0xf0] sm:$0xff] %v2344
        %2377 = vst [vmem:[%s346 + $0xf8] sm:$0xff] %v2345
        %s2378 = sand.u32 %s186, 1
        %s2379 = scalar_lea.sflag [#allocation4], %s2378
        %s2380 = sand.u32 %s186, 1
        %s2381 = smul.addr %s2380, 256
        %s2382 = scalar_lea.vmem [#allocation10], %s2381
        // Predicated region
        $region65: #{_lambda_.1} parent=47 // pred_check
          %p2383 = pneg %p196
        $region66: #{_lambda_.1} parent=47 // pred_check_branch
          %2385 = sbr.rel (%p2383) target = $region68
        $region67: #{_lambda_.1} parent=47 // pred_region
          %s2386 = smul.u32 32, %s26
          %2388 = vsyncadd %s2379, 0
          %s2389 = smul.addr %s2386, 8
          %s2390 = scalar_lea.hbm %s7, %s2389
          %s2391 = sshll.u32 %s2382, 4
          %s2392 = int_to_ptr.vmem [resolvable:$true] %s2391
          %s2393 = sshll.u32 %s2390, 4
          %s2394 = int_to_ptr.hbm [resolvable:$true] %s2393
          %2399 = dma.vmem_to_hbm [thread:$0]  %s2392, 4096, %s2394, %s2379, 128, 128, 8
        $region68: #{_lambda_.1} parent=47 // pred_fallthru
          _
      $region48: #{_lambda_.1} parent=5 // pred_fallthru
        _
      %p2400 = scmp.le.s32.totalorder 2, %s21
      // Predicated region
      $region69: #{_lambda_.1} parent=5 // pred_check
        %p2401 = pneg %p2400
      $region70: #{_lambda_.1} parent=5 // pred_check_branch
        %2403 = sbr.rel (%p2401) target = $region72
      $region71: #{_lambda_.1} parent=5 // pred_region
        %s2404 = ssub.s32 %s21, 2
        // Predicated region
        $region73: #{_lambda_.1} parent=71 // pred_check
          %p2405 = pneg %p202
        $region74: #{_lambda_.1} parent=71 // pred_check_branch
          %2407 = sbr.rel (%p2405) target = $region76
        $region75: #{_lambda_.1} parent=71 // pred_region
          %s2408 = sand.u32 %s187, 1
          %s2409 = scalar_lea.sflag [#allocation4], %s2408
          %s2410 = sand.u32 %s187, 1
          %s2411 = smul.addr %s2410, 256
          %s2412 = scalar_lea.vmem [#allocation10], %s2411
          %2414 = dma.done %s2409, 4096
        $region76: #{_lambda_.1} parent=71 // pred_fallthru
          _
      $region72: #{_lambda_.1} parent=5 // pred_fallthru
        _
    $region6: #{_lambda_.1} parent=1 // loop_footer
      %s25 = sadd.s32 1, %s21
    $region7: #{_lambda_.1} parent=1 // loop_footer_branch
      %20 = sbr.rel target = $region3
    $region8: #{_lambda_.1} parent=1 // loop_exit
      _
    %2415 = vsyncpa [#allocation3], 1
    %s2416 = scalar_lea.sflag [#allocation3], 1
    %2417 = vsyncpa %s2416, 1
    %2418 = vsyncpa [#allocation6], 1
    %2419 = vsyncpa [#allocation9], 1
    %2420 = vsyncpa [#allocation4], 1
    %s2421 = scalar_lea.sflag [#allocation4], 1
    %2422 = vsyncpa %s2421, 1

</llo_original>
